<compile_context>
chip_gen: v6e
topology: v6e:2x2x1
jax: 0.10.0
libtpu: 0.0.40
codegen_flags: <defaults>
</compile_context>

<pallas_src>
import functools
import math

import jax
import jax.numpy as jnp
from jax import lax
from jax.experimental import pallas as pl
from jax.experimental.pallas import tpu as pltpu

EPS = 1e-5
BN_SCALE = 1.0 / math.sqrt(1.0 + EPS)   # eval-mode BN with default stats, gamma=1, beta=0


def _round_up(x, m):
    return (x + m - 1) // m * m


# ----------------------------------------------------------------------------- kernels

def _dw3x3_kernel(x_ref, w_ref, o_ref, *, dil):
    """3x3 depthwise conv, stride 1, dilation `dil`, for one (batch, channel-block).

    x_ref: (1, Hp, Wp, CB) f32   spatially pre-padded input
    w_ref: (16, CB)        f32   rows 0..8 = taps (ky, kx) row-major; BN1 scale folded in
    o_ref: (1, Ho, Wo, CB) bf16  Ho = Hp - 2*dil, Wo = Wp - 2*dil
    """
    Ho, Wo = o_ref.shape[1], o_ref.shape[2]
    acc = jnp.zeros(o_ref.shape, jnp.float32)
    for t in range(9):
        ky, kx = t // 3, t % 3
        tap = x_ref[:, pl.ds(ky * dil, Ho), pl.ds(kx * dil, Wo), :]
        acc = acc + tap * w_ref[t, :]
    o_ref[...] = acc.astype(o_ref.dtype)


def _matmul_relu_kernel(a_ref, b_ref, o_ref, acc_ref):
    """bf16 x bf16 -> f32 tiled MXU matmul with fused ReLU epilogue (BN2 folded into B)."""
    @pl.when(pl.program_id(2) == 0)
    def _():
        acc_ref[...] = jnp.zeros_like(acc_ref)

    acc_ref[...] += jnp.dot(a_ref[...], b_ref[...],
                            preferred_element_type=jnp.float32)

    @pl.when(pl.program_id(2) == pl.num_programs(2) - 1)
    def _():
        o_ref[...] = jnp.maximum(acc_ref[...], 0.0).astype(o_ref.dtype)


# ----------------------------------------------------------------------------- wrappers

def depthwise3x3(xp, w, *, dil):
    """xp: (N, Hp, Wp, Cp) f32, spatially pre-padded; w: (16, Cp) f32 -> (N, Ho, Wo, Cp) bf16."""
    N, Hp, Wp, Cp = xp.shape
    Ho, Wo = Hp - 2 * dil, Wp - 2 * dil
    CB = 128 if Cp % 128 == 0 else Cp
    return pl.pallas_call(
        functools.partial(_dw3x3_kernel, dil=dil),
        out_shape=jax.ShapeDtypeStruct((N, Ho, Wo, Cp), jnp.bfloat16),
        grid=(N, Cp // CB),
        in_specs=[pl.BlockSpec((1, Hp, Wp, CB), lambda n, c: (n, 0, 0, c)),
                  pl.BlockSpec((16, CB), lambda n, c: (0, c))],
        out_specs=pl.BlockSpec((1, Ho, Wo, CB), lambda n, c: (n, 0, 0, c)),
        compiler_params=pltpu.CompilerParams(
            dimension_semantics=("parallel", "parallel")),
    )(xp, w)


def matmul_relu(a, b):
    """a: (M, K), b: (K, Nc) with K, Nc multiples of 128 -> relu(a @ b) in f32, shape (Mp, Nc)."""
    M, K = a.shape
    _, Nc = b.shape
    # M tile sized to the true M (avoid padding small M up to 128).
    if M >= 1024:
        tm = 256
    elif M >= 256:
        tm = 256 if M % 256 == 0 else 128
    elif M >= 128:
        tm = 128
    else:
        tm = _round_up(max(M, 16), 16)
    Mp = _round_up(M, tm)
    tk = 512 if K % 512 == 0 else (256 if K % 256 == 0 else 128)
    tn = 256 if Nc % 256 == 0 else 128

    a = a.astype(jnp.bfloat16)
    if Mp != M:
        a = jnp.pad(a, ((0, Mp - M), (0, 0)))

    cost = pl.CostEstimate(flops=2 * Mp * K * Nc, transcendentals=0,
                           bytes_accessed=Mp * K * 2 + K * Nc * 2 + Mp * Nc * 4)
    return pl.pallas_call(
        _matmul_relu_kernel,
        out_shape=jax.ShapeDtypeStruct((Mp, Nc), jnp.float32),
        grid=(Mp // tm, Nc // tn, K // tk),
        in_specs=[pl.BlockSpec((tm, tk), lambda i, j, k: (i, k)),
                  pl.BlockSpec((tk, tn), lambda i, j, k: (k, j))],
        out_specs=pl.BlockSpec((tm, tn), lambda i, j, k: (i, j)),
        scratch_shapes=[pltpu.VMEM((tm, tn), jnp.float32)],
        compiler_params=pltpu.CompilerParams(
            dimension_semantics=("parallel", "parallel", "arbitrary"),
            vmem_limit_bytes=32 * 1024 * 1024),
        cost_estimate=cost,
    )(a, b)


# ----------------------------------------------------------------------------- forward

@functools.partial(jax.jit, static_argnames=("out_ch", "stride", "dilation"))
def seq_conv_bn_relu_forward(x_nchw, dw_w, pw_w, *, out_ch, stride=1, dilation=1):
    """Forward of seq_conv_bn_relu. x_nchw: (N, Cin, H, W) f32 -> (N, out_ch, Ho, Wo) f32."""
    N, Cin, H, W = x_nchw.shape
    cin_p = dw_w.shape[1]

    x = jnp.transpose(x_nchw, (0, 2, 3, 1)).astype(jnp.float32)          # NCHW -> NHWC
    x = jnp.pad(x, ((0, 0), (0, 0), (0, 0), (0, cin_p - Cin)))           # lane-dense channels
    pad = ((3 - 1) * (dilation - 1) + 3) // 2                            # == dilation for k=3
    xp = jnp.pad(x, ((0, 0), (pad, pad), (pad, pad), (0, 0)))

    h = depthwise3x3(xp, dw_w, dil=dilation)                             # stride-1, BN1 folded, bf16
    if stride > 1:
        # stride-s 'same' 3x3 conv == stride-1 conv subsampled at strided positions.
        # TODO(synk): compute strided taps in-kernel to save ~stride^2 VPU work/writeback.
        h = h[:, ::stride, ::stride, :]

    Nn, Ho, Wo, _ = h.shape
    M = Nn * Ho * Wo
    out = matmul_relu(h.reshape(M, cin_p), pw_w)                         # 1x1 conv + BN2 + ReLU
    out = out[:M, :out_ch].reshape(Nn, Ho, Wo, out_ch)
    return jnp.transpose(out, (0, 3, 1, 2))                              # NHWC -> NCHW


# ----------------------------------------------------------------------------- params / reference

def init_params(key, in_ch, out_ch):
    k1, k2 = jax.random.split(key)
    cin_p = _round_up(in_ch, 128)
    cout_p = _round_up(out_ch, 128)
    dw_raw = jax.random.normal(k1, (9, in_ch), jnp.float32) * math.sqrt(2.0 / (9 * in_ch))
    pw_raw = jax.random.normal(k2, (in_ch, out_ch), jnp.float32) * math.sqrt(2.0 / out_ch)
    # Fold eval-mode BN scales into the conv weights (bias terms are 0 with default
    # gamma=1, beta=0, running_mean=0, running_var=1). Pad to 128-multiple channels once.
    dw_pal = jnp.zeros((16, cin_p), jnp.float32).at[:9, :in_ch].set(dw_raw * BN_SCALE)
    pw_pal = (jnp.zeros((cin_p, cout_p), jnp.float32)
              .at[:in_ch, :out_ch].set(pw_raw * BN_SCALE)).astype(jnp.bfloat16)
    return {"dw_raw": dw_raw, "pw_raw": pw_raw, "dw_pallas": dw_pal, "pw_pallas": pw_pal}


def reference_forward(x_nchw, dw_raw, pw_raw, stride, dilation):
    """Pure-JAX f32 reference of the PyTorch module's forward (eval-mode BN)."""
    in_ch = dw_raw.shape[1]
    x = jnp.transpose(x_nchw, (0, 2, 3, 1)).astype(jnp.float32)
    pad = ((3 - 1) * (dilation - 1) + 3) // 2
    w_hwio = dw_raw.reshape(3, 3, in_ch)[:, :, None, :]                  # (3,3,1,Cin)
    h = lax.conv_general_dilated(
        x, w_hwio, window_strides=(stride, stride),
        padding=[(pad, pad), (pad, pad)], rhs_dilation=(dilation, dilation),
        dimension_numbers=("NHWC", "HWIO", "NHWC"), feature_group_count=in_ch)
    h = h * BN_SCALE                                                     # BatchNorm2d(in_ch)
    out = jnp.einsum("nhwc,co->nhwo", h, pw_raw) * BN_SCALE              # 1x1 conv + BN(out_ch)
    out = jnp.maximum(out, 0.0)                                          # ReLU
    return jnp.transpose(out, (0, 3, 1, 2))


# ----------------------------------------------------------------------------- main

if __name__ == "__main__":
    root = jax.random.PRNGKey(0)
    k_in, k_par = jax.random.split(root)

    N, IN_CH, OUT_CH, H, W = 2, 32, 64, 16, 16
    x = jax.random.normal(k_in, (N, IN_CH, H, W), jnp.float32)
    params = init_params(k_par, IN_CH, OUT_CH)

    for stride, dilation in [(1, 1), (2, 2)]:
        out = seq_conv_bn_relu_forward(x, params["dw_pallas"], params["pw_pallas"],
                                       out_ch=OUT_CH, stride=stride, dilation=dilation)
        ref = reference_forward(x, params["dw_raw"], params["pw_raw"], stride, dilation)
        out, ref = jax.block_until_ready((out, ref))
        assert out.shape == ref.shape, (out.shape, ref.shape)
        assert out.dtype == jnp.float32
        err = float(jnp.max(jnp.abs(out - ref)) / (jnp.max(jnp.abs(ref)) + 1e-6))
        assert err < 5e-2, f"stride={stride} dil={dilation}: rel-to-max err {err}"

    print("KERNEL_OK")
</pallas_src>

<mosaic_0001>
module attributes {stable_mosaic.version = 11 : i64} {
  func.func @_matmul_relu_kernel(%arg0: i32, %arg1: i32, %arg2: i32, %arg3: memref<256x128xbf16, #tpu.memory_space<vmem>>, %arg4: memref<128x128xbf16, #tpu.memory_space<vmem>>, %arg5: memref<256x128xf32, #tpu.memory_space<vmem>>, %arg6: memref<256x128xf32, #tpu.memory_space<vmem>>) attributes {dimension_semantics = [#tpu.dimension_semantics<parallel>, #tpu.dimension_semantics<parallel>, #tpu.dimension_semantics<arbitrary>], iteration_bounds = array<i64: 2, 1, 1>, scalar_prefetch = 0 : i64, scratch_operands = 1 : i64, tpu.core_type = #tpu.core_type<tc>, window_params = [{transform_indices = @transform_0, window_bounds = array<i64: 256, 128>}, {transform_indices = @transform_1, window_bounds = array<i64: 128, 128>}, {transform_indices = @transform_2, window_bounds = array<i64: 256, 128>}]} {
    %c0_i32 = arith.constant 0 : i32
    %0 = arith.cmpi eq, %arg2, %c0_i32 : i32
    %1 = arith.extui %0 : i1 to i32
    %c0_i32_0 = arith.constant 0 : i32
    %2 = arith.cmpi ne, %1, %c0_i32_0 : i32
    scf.if %2 {
      %cst_10 = arith.constant 0.000000e+00 : f32
      %12 = vector.broadcast %cst_10 : f32 to vector<256x128xf32>
      %c0_11 = arith.constant 0 : index
      %c0_12 = arith.constant 0 : index
      %13 = vector.load %arg6[%c0_11, %c0_12] : memref<256x128xf32, #tpu.memory_space<vmem>>, vector<256x128xf32>
      tpu.vector_store %arg6[%c0_11, %c0_12], %12 {strides = array<i32>} : memref<256x128xf32, #tpu.memory_space<vmem>>, vector<256x128xf32>,
    } else {
    }
    %c0 = arith.constant 0 : index
    %c0_1 = arith.constant 0 : index
    %3 = vector.load %arg6[%c0, %c0_1] : memref<256x128xf32, #tpu.memory_space<vmem>>, vector<256x128xf32>
    %c0_2 = arith.constant 0 : index
    %c0_3 = arith.constant 0 : index
    %4 = vector.load %arg3[%c0_2, %c0_3] : memref<256x128xbf16, #tpu.memory_space<vmem>>, vector<256x128xbf16>
    %c0_4 = arith.constant 0 : index
    %c0_5 = arith.constant 0 : index
    %5 = vector.load %arg4[%c0_4, %c0_5] : memref<128x128xbf16, #tpu.memory_space<vmem>>, vector<128x128xbf16>
    %cst = arith.constant dense<0.000000e+00> : vector<256x128xf32>
    %6 = tpu.matmul %4, %5, %cst {dimension_numbers = #tpu.dot_dimension_numbers<[1], [0], [0], [1], [0, 0, 1, 1], [], []>} : vector<256x128xbf16>, vector<128x128xbf16>, vector<256x128xf32> -> vector<256x128xf32>
    %7 = arith.addf %3, %6 : vector<256x128xf32>
    %c0_6 = arith.constant 0 : index
    %c0_7 = arith.constant 0 : index
    %8 = vector.load %arg6[%c0_6, %c0_7] : memref<256x128xf32, #tpu.memory_space<vmem>>, vector<256x128xf32>
    tpu.vector_store %arg6[%c0_6, %c0_7], %7 {strides = array<i32>} : memref<256x128xf32, #tpu.memory_space<vmem>>, vector<256x128xf32>,
    %c0_i32_8 = arith.constant 0 : i32
    %9 = arith.cmpi eq, %arg2, %c0_i32_8 : i32
    %10 = arith.extui %9 : i1 to i32
    %c0_i32_9 = arith.constant 0 : i32
    %11 = arith.cmpi ne, %10, %c0_i32_9 : i32
    scf.if %11 {
      %c0_10 = arith.constant 0 : index
      %c0_11 = arith.constant 0 : index
      %12 = vector.load %arg6[%c0_10, %c0_11] : memref<256x128xf32, #tpu.memory_space<vmem>>, vector<256x128xf32>
      %cst_12 = arith.constant 0.000000e+00 : f32
      %13 = vector.broadcast %cst_12 : f32 to vector<256x128xf32>
      %14 = arith.maximumf %12, %13 : vector<256x128xf32>
      %c0_13 = arith.constant 0 : index
      %c0_14 = arith.constant 0 : index
      %15 = vector.load %arg5[%c0_13, %c0_14] : memref<256x128xf32, #tpu.memory_space<vmem>>, vector<256x128xf32>
      tpu.vector_store %arg5[%c0_13, %c0_14], %14 {strides = array<i32>} : memref<256x128xf32, #tpu.memory_space<vmem>>, vector<256x128xf32>,
    } else {
    }
    return
  }
  func.func @transform_0(%arg0: i32, %arg1: i32, %arg2: i32) -> (i32, i32) {
    %c0_i32 = arith.constant 0 : i32
    return %arg0, %arg2 : i32, i32
  }
  func.func @transform_1(%arg0: i32, %arg1: i32, %arg2: i32) -> (i32, i32) {
    %c0_i32 = arith.constant 0 : i32
    return %arg2, %arg1 : i32, i32
  }
  func.func @transform_2(%arg0: i32, %arg1: i32, %arg2: i32) -> (i32, i32) {
    %c0_i32 = arith.constant 0 : i32
    return %arg0, %arg1 : i32, i32
  }
}

module attributes {stable_mosaic.version = 11 : i64} {
  func.func @_dw3x3_kernel(%arg0: i32, %arg1: i32, %arg2: memref<1x18x18x128xf32, #tpu.memory_space<vmem>>, %arg3: memref<16x128xf32, #tpu.memory_space<vmem>>, %arg4: memref<1x16x16x128xbf16, #tpu.memory_space<vmem>>) attributes {dimension_semantics = [#tpu.dimension_semantics<parallel>, #tpu.dimension_semantics<parallel>], iteration_bounds = array<i64: 2, 1>, scalar_prefetch = 0 : i64, scratch_operands = 0 : i64, tpu.core_type = #tpu.core_type<tc>, window_params = [{transform_indices = @transform_0, window_bounds = array<i64: 1, 18, 18, 128>}, {transform_indices = @transform_1, window_bounds = array<i64: 16, 128>}, {transform_indices = @transform_2, window_bounds = array<i64: 1, 16, 16, 128>}]} {
    %cst = arith.constant 0.000000e+00 : f32
    %0 = vector.broadcast %cst : f32 to vector<1x16x16x128xf32>
    %c0 = arith.constant 0 : index
    %c0_0 = arith.constant 0 : index
    %c0_1 = arith.constant 0 : index
    %c0_2 = arith.constant 0 : index
    %1 = vector.load %arg2[%c0, %c0_0, %c0_1, %c0_2] : memref<1x18x18x128xf32, #tpu.memory_space<vmem>>, vector<1x16x16x128xf32>
    %c0_3 = arith.constant 0 : index
    %c0_4 = arith.constant 0 : index
    %2 = vector.load %arg3[%c0_3, %c0_4] : memref<16x128xf32, #tpu.memory_space<vmem>>, vector<1x128xf32>
    %3 = vector.shape_cast %2 : vector<1x128xf32> to vector<128xf32>
    %4 = vector.shape_cast %3 : vector<128xf32> to vector<1x1x1x128xf32>
    %5 = vector.broadcast %4 : vector<1x1x1x128xf32> to vector<1x16x16x128xf32>
    %6 = arith.mulf %1, %5 : vector<1x16x16x128xf32>
    %7 = arith.addf %0, %6 : vector<1x16x16x128xf32>
    %c0_5 = arith.constant 0 : index
    %c0_6 = arith.constant 0 : index
    %c1 = arith.constant 1 : index
    %c0_7 = arith.constant 0 : index
    %8 = vector.load %arg2[%c0_5, %c0_6, %c1, %c0_7] : memref<1x18x18x128xf32, #tpu.memory_space<vmem>>, vector<1x16x16x128xf32>
    %c1_8 = arith.constant 1 : index
    %c0_9 = arith.constant 0 : index
    %9 = vector.load %arg3[%c1_8, %c0_9] : memref<16x128xf32, #tpu.memory_space<vmem>>, vector<1x128xf32>
    %10 = vector.shape_cast %9 : vector<1x128xf32> to vector<128xf32>
    %11 = vector.shape_cast %10 : vector<128xf32> to vector<1x1x1x128xf32>
    %12 = vector.broadcast %11 : vector<1x1x1x128xf32> to vector<1x16x16x128xf32>
    %13 = arith.mulf %8, %12 : vector<1x16x16x128xf32>
    %14 = arith.addf %7, %13 : vector<1x16x16x128xf32>
    %c0_10 = arith.constant 0 : index
    %c0_11 = arith.constant 0 : index
    %c2 = arith.constant 2 : index
    %c0_12 = arith.constant 0 : index
    %15 = vector.load %arg2[%c0_10, %c0_11, %c2, %c0_12] : memref<1x18x18x128xf32, #tpu.memory_space<vmem>>, vector<1x16x16x128xf32>
    %c2_13 = arith.constant 2 : index
    %c0_14 = arith.constant 0 : index
    %16 = vector.load %arg3[%c2_13, %c0_14] : memref<16x128xf32, #tpu.memory_space<vmem>>, vector<1x128xf32>
    %17 = vector.shape_cast %16 : vector<1x128xf32> to vector<128xf32>
    %18 = vector.shape_cast %17 : vector<128xf32> to vector<1x1x1x128xf32>
    %19 = vector.broadcast %18 : vector<1x1x1x128xf32> to vector<1x16x16x128xf32>
    %20 = arith.mulf %15, %19 : vector<1x16x16x128xf32>
    %21 = arith.addf %14, %20 : vector<1x16x16x128xf32>
    %c0_15 = arith.constant 0 : index
    %c1_16 = arith.constant 1 : index
    %c0_17 = arith.constant 0 : index
    %c0_18 = arith.constant 0 : index
    %22 = vector.load %arg2[%c0_15, %c1_16, %c0_17, %c0_18] : memref<1x18x18x128xf32, #tpu.memory_space<vmem>>, vector<1x16x16x128xf32>
    %c3 = arith.constant 3 : index
    %c0_19 = arith.constant 0 : index
    %23 = vector.load %arg3[%c3, %c0_19] : memref<16x128xf32, #tpu.memory_space<vmem>>, vector<1x128xf32>
    %24 = vector.shape_cast %23 : vector<1x128xf32> to vector<128xf32>
    %25 = vector.shape_cast %24 : vector<128xf32> to vector<1x1x1x128xf32>
    %26 = vector.broadcast %25 : vector<1x1x1x128xf32> to vector<1x16x16x128xf32>
    %27 = arith.mulf %22, %26 : vector<1x16x16x128xf32>
    %28 = arith.addf %21, %27 : vector<1x16x16x128xf32>
    %c0_20 = arith.constant 0 : index
    %c1_21 = arith.constant 1 : index
    %c1_22 = arith.constant 1 : index
    %c0_23 = arith.constant 0 : index
    %29 = vector.load %arg2[%c0_20, %c1_21, %c1_22, %c0_23] : memref<1x18x18x128xf32, #tpu.memory_space<vmem>>, vector<1x16x16x128xf32>
    %c4 = arith.constant 4 : index
    %c0_24 = arith.constant 0 : index
    %30 = vector.load %arg3[%c4, %c0_24] : memref<16x128xf32, #tpu.memory_space<vmem>>, vector<1x128xf32>
    %31 = vector.shape_cast %30 : vector<1x128xf32> to vector<128xf32>
    %32 = vector.shape_cast %31 : vector<128xf32> to vector<1x1x1x128xf32>
    %33 = vector.broadcast %32 : vector<1x1x1x128xf32> to vector<1x16x16x128xf32>
    %34 = arith.mulf %29, %33 : vector<1x16x16x128xf32>
    %35 = arith.addf %28, %34 : vector<1x16x16x128xf32>
    %c0_25 = arith.constant 0 : index
    %c1_26 = arith.constant 1 : index
    %c2_27 = arith.constant 2 : index
    %c0_28 = arith.constant 0 : index
    %36 = vector.load %arg2[%c0_25, %c1_26, %c2_27, %c0_28] : memref<1x18x18x128xf32, #tpu.memory_space<vmem>>, vector<1x16x16x128xf32>
    %c5 = arith.constant 5 : index
    %c0_29 = arith.constant 0 : index
    %37 = vector.load %arg3[%c5, %c0_29] : memref<16x128xf32, #tpu.memory_space<vmem>>, vector<1x128xf32>
    %38 = vector.shape_cast %37 : vector<1x128xf32> to vector<128xf32>
    %39 = vector.shape_cast %38 : vector<128xf32> to vector<1x1x1x128xf32>
    %40 = vector.broadcast %39 : vector<1x1x1x128xf32> to vector<1x16x16x128xf32>
    %41 = arith.mulf %36, %40 : vector<1x16x16x128xf32>
    %42 = arith.addf %35, %41 : vector<1x16x16x128xf32>
    %c0_30 = arith.constant 0 : index
    %c2_31 = arith.constant 2 : index
    %c0_32 = arith.constant 0 : index
    %c0_33 = arith.constant 0 : index
    %43 = vector.load %arg2[%c0_30, %c2_31, %c0_32, %c0_33] : memref<1x18x18x128xf32, #tpu.memory_space<vmem>>, vector<1x16x16x128xf32>
    %c6 = arith.constant 6 : index
    %c0_34 = arith.constant 0 : index
    %44 = vector.load %arg3[%c6, %c0_34] : memref<16x128xf32, #tpu.memory_space<vmem>>, vector<1x128xf32>
    %45 = vector.shape_cast %44 : vector<1x128xf32> to vector<128xf32>
    %46 = vector.shape_cast %45 : vector<128xf32> to vector<1x1x1x128xf32>
    %47 = vector.broadcast %46 : vector<1x1x1x128xf32> to vector<1x16x16x128xf32>
    %48 = arith.mulf %43, %47 : vector<1x16x16x128xf32>
    %49 = arith.addf %42, %48 : vector<1x16x16x128xf32>
    %c0_35 = arith.constant 0 : index
    %c2_36 = arith.constant 2 : index
    %c1_37 = arith.constant 1 : index
    %c0_38 = arith.constant 0 : index
    %50 = vector.load %arg2[%c0_35, %c2_36, %c1_37, %c0_38] : memref<1x18x18x128xf32, #tpu.memory_space<vmem>>, vector<1x16x16x128xf32>
    %c7 = arith.constant 7 : index
    %c0_39 = arith.constant 0 : index
    %51 = vector.load %arg3[%c7, %c0_39] : memref<16x128xf32, #tpu.memory_space<vmem>>, vector<1x128xf32>
    %52 = vector.shape_cast %51 : vector<1x128xf32> to vector<128xf32>
    %53 = vector.shape_cast %52 : vector<128xf32> to vector<1x1x1x128xf32>
    %54 = vector.broadcast %53 : vector<1x1x1x128xf32> to vector<1x16x16x128xf32>
    %55 = arith.mulf %50, %54 : vector<1x16x16x128xf32>
    %56 = arith.addf %49, %55 : vector<1x16x16x128xf32>
    %c0_40 = arith.constant 0 : index
    %c2_41 = arith.constant 2 : index
    %c2_42 = arith.constant 2 : index
    %c0_43 = arith.constant 0 : index
    %57 = vector.load %arg2[%c0_40, %c2_41, %c2_42, %c0_43] : memref<1x18x18x128xf32, #tpu.memory_space<vmem>>, vector<1x16x16x128xf32>
    %c8 = arith.constant 8 : index
    %c0_44 = arith.constant 0 : index
    %58 = vector.load %arg3[%c8, %c0_44] : memref<16x128xf32, #tpu.memory_space<vmem>>, vector<1x128xf32>
    %59 = vector.shape_cast %58 : vector<1x128xf32> to vector<128xf32>
    %60 = vector.shape_cast %59 : vector<128xf32> to vector<1x1x1x128xf32>
    %61 = vector.broadcast %60 : vector<1x1x1x128xf32> to vector<1x16x16x128xf32>
    %62 = arith.mulf %57, %61 : vector<1x16x16x128xf32>
    %63 = arith.addf %56, %62 : vector<1x16x16x128xf32>
    %64 = arith.truncf %63 : vector<1x16x16x128xf32> to vector<1x16x16x128xbf16>
    %c0_45 = arith.constant 0 : index
    %c0_46 = arith.constant 0 : index
    %c0_47 = arith.constant 0 : index
    %c0_48 = arith.constant 0 : index
    %65 = vector.load %arg4[%c0_45, %c0_46, %c0_47, %c0_48] : memref<1x16x16x128xbf16, #tpu.memory_space<vmem>>, vector<1x16x16x128xbf16>
    tpu.vector_store %arg4[%c0_45, %c0_46, %c0_47, %c0_48], %64 {strides = array<i32>} : memref<1x16x16x128xbf16, #tpu.memory_space<vmem>>, vector<1x16x16x128xbf16>,
    return
  }
  func.func @transform_0(%arg0: i32, %arg1: i32) -> (i32, i32, i32, i32) {
    %c0_i32 = arith.constant 0 : i32
    %c0_i32_0 = arith.constant 0 : i32
    %c0_i32_1 = arith.constant 0 : i32
    return %arg0, %c0_i32, %c0_i32_0, %arg1 : i32, i32, i32, i32
  }
  func.func @transform_1(%arg0: i32, %arg1: i32) -> (i32, i32) {
    %c0_i32 = arith.constant 0 : i32
    %c0_i32_0 = arith.constant 0 : i32
    return %c0_i32, %arg1 : i32, i32
  }
  func.func @transform_2(%arg0: i32, %arg1: i32) -> (i32, i32, i32, i32) {
    %c0_i32 = arith.constant 0 : i32
    %c0_i32_0 = arith.constant 0 : i32
    %c0_i32_1 = arith.constant 0 : i32
    return %arg0, %c0_i32, %c0_i32_0, %arg1 : i32, i32, i32, i32
  }
}

</mosaic_0001>

<llo_original>
// kernel: seq_conv_bn_relu_forward.3
$region0: #{seq_conv_bn_relu_forward.3}
  #allocation0 [shape = 'u32[]', space=smem, size = 0x4, offset = 0x4, fixed_abs, tag = 'smem constant byte address 0x4 - core index']
  #allocation1 [shape = 'u32[144,128]{1,0:T(1,128)}', space=vmem, size = 0x12000, scoped, tag = 'internal scratch']
  #allocation2 [shape = 'f32[256,128]{1,0:T(8,128)}', space=vmem, size = 0x20000, scoped, tag = 'scratch operand']
  %s0 = inlined_call_operand.vmem [shape: bf16[512,128], index: 0, kind: input, shape index: {}]
  %s1 = inlined_call_operand.vmem [shape: bf16[128,128], index: 1, kind: input, shape index: {}]
  %s2 = inlined_call_operand.hbm [shape: f32[512,128], index: 2, kind: output, shape index: {}]
  %s3 = sld [smem:[#allocation0]]
  $region49: #{seq_conv_bn_relu_forward.3} parent=0
    _
  %s5 = ssub.s32 1, %s3
  %s6 = scalar_select 0, %s5, %s3
  $region1: #{seq_conv_bn_relu_forward.3} parent=0
    #allocation3 [shape = 'u8[262144]{0}', space=vmem, size = 0x40000, scoped, tag = 'output window, operand 0']
    #allocation4 [shape = 's32[2]{0}', space=sflag, size = 0x8, scoped, tag = 'scoped memory for seq_conv_bn_relu_forward.3']
    %7 = vsyncpa [#allocation4], 0
    %s8 = scalar_lea.sflag [#allocation4], 1
    %9 = vsyncpa %s8, 0
    loop: start=0, step=1, limit=4
    $region2: #{seq_conv_bn_relu_forward.3} parent=1 // loop_pre_header
      _
    $region3: #{seq_conv_bn_relu_forward.3} parent=1 // loop_header
      %s11 = sphi 0, %s15
      %p12 = scmp.ge.s32.totalorder %s11, 4
      %s18 = sphi 0, %s37
      %s19 = sphi 0, %s33
      %s20 = sphi 0, %s29
      %s21 = sphi 0, %s18
      %s22 = sphi 0, %s19
      %s23 = sphi 0, %s20
      %s24 = sphi 0, %s21
      %s25 = sphi 0, %s22
      %s26 = sphi 0, %s23
      %s42 = sphi 0, %s44
      %s45 = sphi 0, %s42
      %s46 = sphi 0, %s45
      %s62 = sphi 0, %s46
      %s70 = sphi 0, %s72
      %s73 = sphi 0, %s70
      %s74 = sphi 0, %s73
      %s90 = sphi 0, %s74
      %s98 = sphi 0, %s100
      %s101 = sphi 0, %s98
      %s102 = sphi 0, %s101
      %s118 = sphi 0, %s102
    $region4: #{seq_conv_bn_relu_forward.3} parent=1 // loop_header_branch
      %14 = sbr.rel (%p12) target = $region8
    $region5: #{seq_conv_bn_relu_forward.3} parent=1 // loop_body
      %s16 = ssub.s32 %s11, 1
      %s17 = ssub.s32 %s11, 2
      %s27 = sadd.s32 1, %s20
      %p28 = scmp.ge.s32.totalorder %s27, 1
      %s29 = scalar_select %p28, 0, %s27
      %s30 = sadd.s32 1, %s19
      %s31 = scalar_select %p28, %s30, %s19
      %p32 = scmp.ge.s32.totalorder %s31, 1
      %s33 = scalar_select %p32, 0, %s31
      %s34 = sadd.s32 1, %s18
      %s35 = scalar_select %p32, %s34, %s18
      %p36 = scmp.ge.s32.totalorder %s35, 2
      %s37 = scalar_select %p36, 0, %s35
      %s38 = ssub.s32 %s18, %s37
      %s39 = ssub.s32 %s20, %s29
      %s40 = sor.u32 %s38, %s39
      %p41 = scmp.eq.s32.totalorder %s40, 0
      %s43 = sadd.s32 %s42, 1
      %s44 = scalar_select %p41, %s42, %s43
      %p47 = pneg %p41
      %p48 = scmp.eq.s32.totalorder %s11, 1
      %p49 = por %p47, %p48
      %p50 = scmp.ne.s32.totalorder %s42, %s45
      %p51 = scmp.eq.s32.totalorder %s11, 0
      %p52 = por %p50, %p51
      %p53 = scmp.ne.s32.totalorder %s42, %s45
      %p54 = scmp.eq.s32.totalorder %s16, 1
      %p55 = por %p53, %p54
      %p56 = scmp.ne.s32.totalorder %s45, %s46
      %p57 = scmp.eq.s32.totalorder %s16, 0
      %p58 = por %p56, %p57
      %p59 = scmp.ne.s32.totalorder %s45, %s46
      %p60 = scmp.eq.s32.totalorder %s17, 1
      %p61 = por %p59, %p60
      %p63 = scmp.ne.s32.totalorder %s46, %s62
      %p64 = scmp.eq.s32.totalorder %s17, 0
      %p65 = por %p63, %p64
      %s66 = ssub.s32 %s20, %s29
      %s67 = ssub.s32 %s19, %s33
      %s68 = sor.u32 %s66, %s67
      %p69 = scmp.eq.s32.totalorder %s68, 0
      %s71 = sadd.s32 %s70, 1
      %s72 = scalar_select %p69, %s70, %s71
      %p75 = pneg %p69
      %p76 = scmp.eq.s32.totalorder %s11, 1
      %p77 = por %p75, %p76
      %p78 = scmp.ne.s32.totalorder %s70, %s73
      %p79 = scmp.eq.s32.totalorder %s11, 0
      %p80 = por %p78, %p79
      %p81 = scmp.ne.s32.totalorder %s70, %s73
      %p82 = scmp.eq.s32.totalorder %s16, 1
      %p83 = por %p81, %p82
      %p84 = scmp.ne.s32.totalorder %s73, %s74
      %p85 = scmp.eq.s32.totalorder %s16, 0
      %p86 = por %p84, %p85
      %p87 = scmp.ne.s32.totalorder %s73, %s74
      %p88 = scmp.eq.s32.totalorder %s17, 1
      %p89 = por %p87, %p88
      %p91 = scmp.ne.s32.totalorder %s74, %s90
      %p92 = scmp.eq.s32.totalorder %s17, 0
      %p93 = por %p91, %p92
      %s94 = ssub.s32 %s18, %s37
      %s95 = ssub.s32 %s19, %s33
      %s96 = sor.u32 %s94, %s95
      %p97 = scmp.eq.s32.totalorder %s96, 0
      %s99 = sadd.s32 %s98, 1
      %s100 = scalar_select %p97, %s98, %s99
      %p103 = pneg %p97
      %p104 = scmp.eq.s32.totalorder %s11, 1
      %p105 = por %p103, %p104
      %p106 = scmp.ne.s32.totalorder %s98, %s101
      %p107 = scmp.eq.s32.totalorder %s11, 0
      %p108 = por %p106, %p107
      %p109 = scmp.ne.s32.totalorder %s98, %s101
      %p110 = scmp.eq.s32.totalorder %s16, 1
      %p111 = por %p109, %p110
      %p112 = scmp.ne.s32.totalorder %s101, %s102
      %p113 = scmp.eq.s32.totalorder %s16, 0
      %p114 = por %p112, %p113
      %p115 = scmp.ne.s32.totalorder %s101, %s102
      %p116 = scmp.eq.s32.totalorder %s17, 1
      %p117 = por %p115, %p116
      %p119 = scmp.ne.s32.totalorder %s102, %s118
      %p120 = scmp.eq.s32.totalorder %s17, 0
      %p121 = por %p119, %p120
      %p122 = scmp.le.s32.totalorder 1, %s11
      %p123 = scmp.lt.s32.totalorder %s11, 3
      %p124 = pnand %p122, %p123
      %p125 = pneg %p124
      // Predicated region
      $region9: #{seq_conv_bn_relu_forward.3} parent=5 // pred_check
        _
      $region10: #{seq_conv_bn_relu_forward.3} parent=5 // pred_check_branch
        %127 = sbr.rel (%p124) target = $region12
      $region11: #{seq_conv_bn_relu_forward.3} parent=5 // pred_region
        %s128 = ssub.s32 %s11, 1
        // Predicated region
        $region13: #{seq_conv_bn_relu_forward.3} parent=11 // pred_check
          %p129 = pneg %p86
        $region14: #{seq_conv_bn_relu_forward.3} parent=11 // pred_check_branch
          %131 = sbr.rel (%p129) target = $region16
        $region15: #{seq_conv_bn_relu_forward.3} parent=11 // pred_region
          %s132 = smul.u32 16, %s23
          %p133 = scmp.lt.s32.totalorder %s132, 15
          %s134 = scalar_select %p133, %s132, 15
          %p135 = scmp.lt.s32.totalorder %s22, 0
          %s136 = scalar_select %p135, %s22, 0
          %s137 = sadd.s32 %s136, %s134
          %s138 = smul.addr %s137, 4
          %s139 = scalar_lea.vmem %s1, %s138
          %s140 = smul.u32 16, %s23
        $region16: #{seq_conv_bn_relu_forward.3} parent=11 // pred_fallthru
          _
      $region12: #{seq_conv_bn_relu_forward.3} parent=5 // pred_fallthru
        _
      %p141 = scmp.lt.s32.totalorder %s11, 2
      // Predicated region
      $region17: #{seq_conv_bn_relu_forward.3} parent=5 // pred_check
        %p142 = pneg %p141
      $region18: #{seq_conv_bn_relu_forward.3} parent=5 // pred_check_branch
        %144 = sbr.rel (%p142) target = $region20
      $region19: #{seq_conv_bn_relu_forward.3} parent=5 // pred_region
        // Predicated region
        $region21: #{seq_conv_bn_relu_forward.3} parent=19 // pred_check
          %p145 = pneg %p52
        $region22: #{seq_conv_bn_relu_forward.3} parent=19 // pred_check_branch
          %147 = sbr.rel (%p145) target = $region24
        $region23: #{seq_conv_bn_relu_forward.3} parent=19 // pred_region
          %s148 = smul.u32 32, %s18
          %p149 = scmp.lt.s32.totalorder %s148, 63
          %s150 = scalar_select %p149, %s148, 63
          %p151 = scmp.lt.s32.totalorder %s20, 0
          %s152 = scalar_select %p151, %s20, 0
          %s153 = sadd.s32 %s152, %s150
          %s154 = smul.addr %s153, 4
          %s155 = scalar_lea.vmem %s0, %s154
          %s156 = smul.u32 32, %s18
        $region24: #{seq_conv_bn_relu_forward.3} parent=19 // pred_fallthru
          _
      $region20: #{seq_conv_bn_relu_forward.3} parent=5 // pred_fallthru
        _
      %p157 = scmp.le.s32.totalorder 1, %s11
      %p158 = scmp.lt.s32.totalorder %s11, 3
      %p159 = pnand %p157, %p158
      %p160 = pneg %p159
      // Predicated region
      $region25: #{seq_conv_bn_relu_forward.3} parent=5 // pred_check
        _
      $region26: #{seq_conv_bn_relu_forward.3} parent=5 // pred_check_branch
        %162 = sbr.rel (%p159) target = $region28
      $region27: #{seq_conv_bn_relu_forward.3} parent=5 // pred_region
        %s163 = ssub.s32 %s11, 1
        %s164 = smul.u32 32, %s21
        %p165 = scmp.lt.s32.totalorder %s164, 63
        %s166 = scalar_select %p165, %s164, 63
        %p167 = scmp.lt.s32.totalorder %s23, 0
        %s168 = scalar_select %p167, %s23, 0
        %s169 = sadd.s32 %s168, %s166
        %s170 = smul.addr %s169, 4
        %s171 = scalar_lea.vmem %s0, %s170
        %p172 = pneg %p58
        %p173 = pneg %p55
        %s174 = smul.u32 16, %s23
        %p175 = scmp.lt.s32.totalorder %s174, 15
        %s176 = scalar_select %p175, %s174, 15
        %p177 = scmp.lt.s32.totalorder %s22, 0
        %s178 = scalar_select %p177, %s22, 0
        %s179 = sadd.s32 %s178, %s176
        %s180 = smul.addr %s179, 4
        %s181 = scalar_lea.vmem %s1, %s180
        %p182 = pneg %p86
        %p183 = pneg %p83
        %p184 = pneg %p114
        %p185 = pneg %p111
        %s186 = sand.u32 %s101, 1
        %s187 = scalar_lea.sflag [#allocation4], %s186
        %s188 = sand.u32 %s101, 1
        %s189 = smul.addr %s188, 256
        %s190 = scalar_lea.vmem [#allocation3], %s189
        %s191 = smul.u32 32, %s21
        %p192 = scmp.lt.s32.totalorder %s191, 63
        %s193 = scalar_select %p192, %s191, 63
        %p194 = scmp.lt.s32.totalorder %s23, 0
        %s195 = scalar_select %p194, %s23, 0
        %s196 = sadd.s32 %s195, %s193
        %s197 = smul.addr %s196, 4
        %s198 = scalar_lea.vmem %s0, %s197
        %s199 = smul.u32 32, %s21
        %s200 = smul.u32 16, %s23
        %p201 = scmp.lt.s32.totalorder %s200, 15
        %s202 = scalar_select %p201, %s200, 15
        %p203 = scmp.lt.s32.totalorder %s22, 0
        %s204 = scalar_select %p203, %s22, 0
        %s205 = sadd.s32 %s204, %s202
        %s206 = smul.addr %s205, 4
        %s207 = scalar_lea.vmem %s1, %s206
        %s208 = smul.u32 16, %s23
        %s209 = smul.u32 32, %s21
        %p211 = scmp.eq.s32.totalorder %s23, 0
        // Predicated region
        $region29: #{seq_conv_bn_relu_forward.3} parent=27 // pred_check
          %p212 = pneg %p211
        $region30: #{seq_conv_bn_relu_forward.3} parent=27 // pred_check_branch
          %214 = sbr.rel (%p212) target = $region32
        $region31: #{seq_conv_bn_relu_forward.3} parent=27 // pred_region
          %215 = vst [vmem:[#allocation2] sm:$0xff] 0.0
          %216 = vst [vmem:[#allocation2 + $0x8] sm:$0xff] 0.0
          %217 = vst [vmem:[#allocation2 + $0x10] sm:$0xff] 0.0
          %218 = vst [vmem:[#allocation2 + $0x18] sm:$0xff] 0.0
          %219 = vst [vmem:[#allocation2 + $0x20] sm:$0xff] 0.0
          %220 = vst [vmem:[#allocation2 + $0x28] sm:$0xff] 0.0
          %221 = vst [vmem:[#allocation2 + $0x30] sm:$0xff] 0.0
          %222 = vst [vmem:[#allocation2 + $0x38] sm:$0xff] 0.0
          %223 = vst [vmem:[#allocation2 + $0x40] sm:$0xff] 0.0
          %224 = vst [vmem:[#allocation2 + $0x48] sm:$0xff] 0.0
          %225 = vst [vmem:[#allocation2 + $0x50] sm:$0xff] 0.0
          %226 = vst [vmem:[#allocation2 + $0x58] sm:$0xff] 0.0
          %227 = vst [vmem:[#allocation2 + $0x60] sm:$0xff] 0.0
          %228 = vst [vmem:[#allocation2 + $0x68] sm:$0xff] 0.0
          %229 = vst [vmem:[#allocation2 + $0x70] sm:$0xff] 0.0
          %230 = vst [vmem:[#allocation2 + $0x78] sm:$0xff] 0.0
          %231 = vst [vmem:[#allocation2 + $0x80] sm:$0xff] 0.0
          %232 = vst [vmem:[#allocation2 + $0x88] sm:$0xff] 0.0
          %233 = vst [vmem:[#allocation2 + $0x90] sm:$0xff] 0.0
          %234 = vst [vmem:[#allocation2 + $0x98] sm:$0xff] 0.0
          %235 = vst [vmem:[#allocation2 + $0xa0] sm:$0xff] 0.0
          %236 = vst [vmem:[#allocation2 + $0xa8] sm:$0xff] 0.0
          %237 = vst [vmem:[#allocation2 + $0xb0] sm:$0xff] 0.0
          %238 = vst [vmem:[#allocation2 + $0xb8] sm:$0xff] 0.0
          %239 = vst [vmem:[#allocation2 + $0xc0] sm:$0xff] 0.0
          %240 = vst [vmem:[#allocation2 + $0xc8] sm:$0xff] 0.0
          %241 = vst [vmem:[#allocation2 + $0xd0] sm:$0xff] 0.0
          %242 = vst [vmem:[#allocation2 + $0xd8] sm:$0xff] 0.0
          %243 = vst [vmem:[#allocation2 + $0xe0] sm:$0xff] 0.0
          %244 = vst [vmem:[#allocation2 + $0xe8] sm:$0xff] 0.0
          %245 = vst [vmem:[#allocation2 + $0xf0] sm:$0xff] 0.0
          %246 = vst [vmem:[#allocation2 + $0xf8] sm:$0xff] 0.0
        $region32: #{seq_conv_bn_relu_forward.3} parent=27 // pred_fallthru
          _
        %v247 = vld [vmem:[#allocation2] sm:$0xff]
        %v248 = vld [vmem:[#allocation2 + $0x8] sm:$0xff]
        %v249 = vld [vmem:[#allocation2 + $0x10] sm:$0xff]
        %v250 = vld [vmem:[#allocation2 + $0x18] sm:$0xff]
        %v251 = vld [vmem:[#allocation2 + $0x20] sm:$0xff]
        %v252 = vld [vmem:[#allocation2 + $0x28] sm:$0xff]
        %v253 = vld [vmem:[#allocation2 + $0x30] sm:$0xff]
        %v254 = vld [vmem:[#allocation2 + $0x38] sm:$0xff]
        %v255 = vld [vmem:[#allocation2 + $0x40] sm:$0xff]
        %v256 = vld [vmem:[#allocation2 + $0x48] sm:$0xff]
        %v257 = vld [vmem:[#allocation2 + $0x50] sm:$0xff]
        %v258 = vld [vmem:[#allocation2 + $0x58] sm:$0xff]
        %v259 = vld [vmem:[#allocation2 + $0x60] sm:$0xff]
        %v260 = vld [vmem:[#allocation2 + $0x68] sm:$0xff]
        %v261 = vld [vmem:[#allocation2 + $0x70] sm:$0xff]
        %v262 = vld [vmem:[#allocation2 + $0x78] sm:$0xff]
        %v263 = vld [vmem:[#allocation2 + $0x80] sm:$0xff]
        %v264 = vld [vmem:[#allocation2 + $0x88] sm:$0xff]
        %v265 = vld [vmem:[#allocation2 + $0x90] sm:$0xff]
        %v266 = vld [vmem:[#allocation2 + $0x98] sm:$0xff]
        %v267 = vld [vmem:[#allocation2 + $0xa0] sm:$0xff]
        %v268 = vld [vmem:[#allocation2 + $0xa8] sm:$0xff]
        %v269 = vld [vmem:[#allocation2 + $0xb0] sm:$0xff]
        %v270 = vld [vmem:[#allocation2 + $0xb8] sm:$0xff]
        %v271 = vld [vmem:[#allocation2 + $0xc0] sm:$0xff]
        %v272 = vld [vmem:[#allocation2 + $0xc8] sm:$0xff]
        %v273 = vld [vmem:[#allocation2 + $0xd0] sm:$0xff]
        %v274 = vld [vmem:[#allocation2 + $0xd8] sm:$0xff]
        %v275 = vld [vmem:[#allocation2 + $0xe0] sm:$0xff]
        %v276 = vld [vmem:[#allocation2 + $0xe8] sm:$0xff]
        %v277 = vld [vmem:[#allocation2 + $0xf0] sm:$0xff]
        %v278 = vld [vmem:[#allocation2 + $0xf8] sm:$0xff]
        %v279 = vld [vmem:[%s198] sm:$0xf]
        %v280 = vld [vmem:[%s198 + $0x4] sm:$0xf]
        %v281 = vld [vmem:[%s198 + $0x8] sm:$0xf]
        %v282 = vld [vmem:[%s198 + $0xc] sm:$0xf]
        %v283 = vld [vmem:[%s198 + $0x10] sm:$0xf]
        %v284 = vld [vmem:[%s198 + $0x14] sm:$0xf]
        %v285 = vld [vmem:[%s198 + $0x18] sm:$0xf]
        %v286 = vld [vmem:[%s198 + $0x1c] sm:$0xf]
        %v287 = vld [vmem:[%s198 + $0x20] sm:$0xf]
        %v288 = vld [vmem:[%s198 + $0x24] sm:$0xf]
        %v289 = vld [vmem:[%s198 + $0x28] sm:$0xf]
        %v290 = vld [vmem:[%s198 + $0x2c] sm:$0xf]
        %v291 = vld [vmem:[%s198 + $0x30] sm:$0xf]
        %v292 = vld [vmem:[%s198 + $0x34] sm:$0xf]
        %v293 = vld [vmem:[%s198 + $0x38] sm:$0xf]
        %v294 = vld [vmem:[%s198 + $0x3c] sm:$0xf]
        %v295 = vld [vmem:[%s198 + $0x40] sm:$0xf]
        %v296 = vld [vmem:[%s198 + $0x44] sm:$0xf]
        %v297 = vld [vmem:[%s198 + $0x48] sm:$0xf]
        %v298 = vld [vmem:[%s198 + $0x4c] sm:$0xf]
        %v299 = vld [vmem:[%s198 + $0x50] sm:$0xf]
        %v300 = vld [vmem:[%s198 + $0x54] sm:$0xf]
        %v301 = vld [vmem:[%s198 + $0x58] sm:$0xf]
        %v302 = vld [vmem:[%s198 + $0x5c] sm:$0xf]
        %v303 = vld [vmem:[%s198 + $0x60] sm:$0xf]
        %v304 = vld [vmem:[%s198 + $0x64] sm:$0xf]
        %v305 = vld [vmem:[%s198 + $0x68] sm:$0xf]
        %v306 = vld [vmem:[%s198 + $0x6c] sm:$0xf]
        %v307 = vld [vmem:[%s198 + $0x70] sm:$0xf]
        %v308 = vld [vmem:[%s198 + $0x74] sm:$0xf]
        %v309 = vld [vmem:[%s198 + $0x78] sm:$0xf]
        %v310 = vld [vmem:[%s198 + $0x7c] sm:$0xf]
        %v311 = vld [vmem:[%s207] sm:$0xf]
        %v312 = vld [vmem:[%s207 + $0x4] sm:$0xf]
        %v313 = vld [vmem:[%s207 + $0x8] sm:$0xf]
        %v314 = vld [vmem:[%s207 + $0xc] sm:$0xf]
        %v315 = vld [vmem:[%s207 + $0x10] sm:$0xf]
        %v316 = vld [vmem:[%s207 + $0x14] sm:$0xf]
        %v317 = vld [vmem:[%s207 + $0x18] sm:$0xf]
        %v318 = vld [vmem:[%s207 + $0x1c] sm:$0xf]
        %v319 = vld [vmem:[%s207 + $0x20] sm:$0xf]
        %v320 = vld [vmem:[%s207 + $0x24] sm:$0xf]
        %v321 = vld [vmem:[%s207 + $0x28] sm:$0xf]
        %v322 = vld [vmem:[%s207 + $0x2c] sm:$0xf]
        %v323 = vld [vmem:[%s207 + $0x30] sm:$0xf]
        %v324 = vld [vmem:[%s207 + $0x34] sm:$0xf]
        %v325 = vld [vmem:[%s207 + $0x38] sm:$0xf]
        %v326 = vld [vmem:[%s207 + $0x3c] sm:$0xf]
        %v359 = vunpack.c.l.b16 %v279
        %v360 = vunpack.c.l.b16 %v280
        %v361 = vunpack.c.l.b16 %v281
        %v362 = vunpack.c.l.b16 %v282
        %v363 = vunpack.c.l.b16 %v283
        %v364 = vunpack.c.l.b16 %v284
        %v365 = vunpack.c.l.b16 %v285
        %v366 = vunpack.c.l.b16 %v286
        %v367 = vunpack.c.l.b16 %v287
        %v368 = vunpack.c.l.b16 %v288
        %v369 = vunpack.c.l.b16 %v289
        %v370 = vunpack.c.l.b16 %v290
        %v371 = vunpack.c.l.b16 %v291
        %v372 = vunpack.c.l.b16 %v292
        %v373 = vunpack.c.l.b16 %v293
        %v374 = vunpack.c.l.b16 %v294
        %v375 = vunpack.c.l.b16 %v295
        %v376 = vunpack.c.l.b16 %v296
        %v377 = vunpack.c.l.b16 %v297
        %v378 = vunpack.c.l.b16 %v298
        %v379 = vunpack.c.l.b16 %v299
        %v380 = vunpack.c.l.b16 %v300
        %v381 = vunpack.c.l.b16 %v301
        %v382 = vunpack.c.l.b16 %v302
        %v383 = vunpack.c.l.b16 %v303
        %v384 = vunpack.c.l.b16 %v304
        %v385 = vunpack.c.l.b16 %v305
        %v386 = vunpack.c.l.b16 %v306
        %v387 = vunpack.c.l.b16 %v307
        %v388 = vunpack.c.l.b16 %v308
        %v389 = vunpack.c.l.b16 %v309
        %v390 = vunpack.c.l.b16 %v310
        %v391 = vpack.c.b16 %v360, %v359
        %v392 = vpack.c.b16 %v362, %v361
        %v393 = vpack.c.b16 %v364, %v363
        %v394 = vpack.c.b16 %v366, %v365
        %v395 = vpack.c.b16 %v368, %v367
        %v396 = vpack.c.b16 %v370, %v369
        %v397 = vpack.c.b16 %v372, %v371
        %v398 = vpack.c.b16 %v374, %v373
        %v399 = vpack.c.b16 %v376, %v375
        %v400 = vpack.c.b16 %v378, %v377
        %v401 = vpack.c.b16 %v380, %v379
        %v402 = vpack.c.b16 %v382, %v381
        %v403 = vpack.c.b16 %v384, %v383
        %v404 = vpack.c.b16 %v386, %v385
        %v405 = vpack.c.b16 %v388, %v387
        %v406 = vpack.c.b16 %v390, %v389
        %v439 = vunpack.c.l.b16 %v311
        %v440 = vunpack.c.l.b16 %v312
        %v441 = vunpack.c.l.b16 %v313
        %v442 = vunpack.c.l.b16 %v314
        %v443 = vunpack.c.l.b16 %v315
        %v444 = vunpack.c.l.b16 %v316
        %v445 = vunpack.c.l.b16 %v317
        %v446 = vunpack.c.l.b16 %v318
        %v447 = vunpack.c.l.b16 %v319
        %v448 = vunpack.c.l.b16 %v320
        %v449 = vunpack.c.l.b16 %v321
        %v450 = vunpack.c.l.b16 %v322
        %v451 = vunpack.c.l.b16 %v323
        %v452 = vunpack.c.l.b16 %v324
        %v453 = vunpack.c.l.b16 %v325
        %v454 = vunpack.c.l.b16 %v326
        %v455 = vpack.c.b16 %v440, %v439
        %v456 = vpack.c.b16 %v442, %v441
        %v457 = vpack.c.b16 %v444, %v443
        %v458 = vpack.c.b16 %v446, %v445
        %v459 = vpack.c.b16 %v448, %v447
        %v460 = vpack.c.b16 %v450, %v449
        %v461 = vpack.c.b16 %v452, %v451
        %v462 = vpack.c.b16 %v454, %v453
        %471 = vmatprep.subr.bf16.mxu0 0
        %472 = vmatpush1.bf16.msra.mxu0 %v462
        %473 = vmatprep.subr.bf16.mxu0 0
        %474 = vmatpush1.bf16.msra.mxu0 %v461
        %475 = vmatprep.subr.bf16.mxu0 0
        %476 = vmatpush1.bf16.msra.mxu0 %v460
        %477 = vmatprep.subr.bf16.mxu0 0
        %478 = vmatpush1.bf16.msra.mxu0 %v459
        %479 = vmatprep.subr.bf16.mxu0 0
        %480 = vmatpush1.bf16.msra.mxu0 %v458
        %481 = vmatprep.subr.bf16.mxu0 0
        %482 = vmatpush1.bf16.msra.mxu0 %v457
        %483 = vmatprep.subr.bf16.mxu0 0
        %484 = vmatpush1.bf16.msra.mxu0 %v456
        %485 = vmatprep.subr.bf16.mxu0 0
        %486 = vmatpush1.bf16.msra.mxu0 %v455
        %487 = vmatprep.subr.bf16.mxu0 0
        %488 = vmatpush2.bf16.msra.mxu0 0
        %489 = vmatprep.subr.bf16.mxu0 0
        %490 = vmatpush2.bf16.msra.mxu0 0
        %491 = vmatprep.subr.bf16.mxu0 0
        %492 = vmatpush2.bf16.msra.mxu0 0
        %493 = vmatprep.subr.bf16.mxu0 0
        %494 = vmatpush2.bf16.msra.mxu0 0
        %495 = vmatprep.subr.bf16.mxu0 0
        %496 = vmatpush2.bf16.msra.mxu0 0
        %497 = vmatprep.subr.bf16.mxu0 0
        %498 = vmatpush2.bf16.msra.mxu0 0
        %499 = vmatprep.subr.bf16.mxu0 0
        %500 = vmatpush2.bf16.msra.mxu0 0
        %501 = vmatprep.subr.bf16.mxu0 0
        %502 = vmatpush2.bf16.msra.mxu0 0
        %503 = vmatprep.mubr.bf16.mxu0 0
        %504 = vmatmul.mubr.bf16.gmra.mxu0 %v391
        %v505 = vpop.f32.mrf.mxu0
        %v506 = vadd.f32 0.0, %v505
        %v507 = vpop.f32.mrf.mxu0
        %v508 = vpop.f32.mrf.mxu0
        %v509 = vadd.f32 0.0, %v508
        %v510 = vpop.f32.mrf.mxu0
        %511 = vmatprep.mubr.bf16.mxu0 0
        %512 = vmatmul.mubr.bf16.gmra.mxu0 %v392
        %v513 = vpop.f32.mrf.mxu0
        %v514 = vadd.f32 0.0, %v513
        %v515 = vpop.f32.mrf.mxu0
        %v516 = vpop.f32.mrf.mxu0
        %v517 = vadd.f32 0.0, %v516
        %v518 = vpop.f32.mrf.mxu0
        %519 = vmatprep.mubr.bf16.mxu0 0
        %520 = vmatmul.mubr.bf16.gmra.mxu0 %v393
        %v521 = vpop.f32.mrf.mxu0
        %v522 = vadd.f32 0.0, %v521
        %v523 = vpop.f32.mrf.mxu0
        %v524 = vpop.f32.mrf.mxu0
        %v525 = vadd.f32 0.0, %v524
        %v526 = vpop.f32.mrf.mxu0
        %527 = vmatprep.mubr.bf16.mxu0 0
        %528 = vmatmul.mubr.bf16.gmra.mxu0 %v394
        %v529 = vpop.f32.mrf.mxu0
        %v530 = vadd.f32 0.0, %v529
        %v531 = vpop.f32.mrf.mxu0
        %v532 = vpop.f32.mrf.mxu0
        %v533 = vadd.f32 0.0, %v532
        %v534 = vpop.f32.mrf.mxu0
        %535 = vmatprep.mubr.bf16.mxu0 0
        %536 = vmatmul.mubr.bf16.gmra.mxu0 %v395
        %v537 = vpop.f32.mrf.mxu0
        %v538 = vadd.f32 0.0, %v537
        %v539 = vpop.f32.mrf.mxu0
        %v540 = vpop.f32.mrf.mxu0
        %v541 = vadd.f32 0.0, %v540
        %v542 = vpop.f32.mrf.mxu0
        %543 = vmatprep.mubr.bf16.mxu0 0
        %544 = vmatmul.mubr.bf16.gmra.mxu0 %v396
        %v545 = vpop.f32.mrf.mxu0
        %v546 = vadd.f32 0.0, %v545
        %v547 = vpop.f32.mrf.mxu0
        %v548 = vpop.f32.mrf.mxu0
        %v549 = vadd.f32 0.0, %v548
        %v550 = vpop.f32.mrf.mxu0
        %551 = vmatprep.mubr.bf16.mxu0 0
        %552 = vmatmul.mubr.bf16.gmra.mxu0 %v397
        %v553 = vpop.f32.mrf.mxu0
        %v554 = vadd.f32 0.0, %v553
        %v555 = vpop.f32.mrf.mxu0
        %v556 = vpop.f32.mrf.mxu0
        %v557 = vadd.f32 0.0, %v556
        %v558 = vpop.f32.mrf.mxu0
        %559 = vmatprep.mubr.bf16.mxu0 0
        %560 = vmatmul.mubr.bf16.gmra.mxu0 %v398
        %v561 = vpop.f32.mrf.mxu0
        %v562 = vadd.f32 0.0, %v561
        %v563 = vpop.f32.mrf.mxu0
        %v564 = vpop.f32.mrf.mxu0
        %v565 = vadd.f32 0.0, %v564
        %v566 = vpop.f32.mrf.mxu0
        %567 = vmatprep.mubr.bf16.mxu0 0
        %568 = vmatmul.mubr.bf16.gmra.mxu0 %v399
        %v569 = vpop.f32.mrf.mxu0
        %v570 = vadd.f32 0.0, %v569
        %v571 = vpop.f32.mrf.mxu0
        %v572 = vpop.f32.mrf.mxu0
        %v573 = vadd.f32 0.0, %v572
        %v574 = vpop.f32.mrf.mxu0
        %575 = vmatprep.mubr.bf16.mxu0 0
        %576 = vmatmul.mubr.bf16.gmra.mxu0 %v400
        %v577 = vpop.f32.mrf.mxu0
        %v578 = vadd.f32 0.0, %v577
        %v579 = vpop.f32.mrf.mxu0
        %v580 = vpop.f32.mrf.mxu0
        %v581 = vadd.f32 0.0, %v580
        %v582 = vpop.f32.mrf.mxu0
        %583 = vmatprep.mubr.bf16.mxu0 0
        %584 = vmatmul.mubr.bf16.gmra.mxu0 %v401
        %v585 = vpop.f32.mrf.mxu0
        %v586 = vadd.f32 0.0, %v585
        %v587 = vpop.f32.mrf.mxu0
        %v588 = vpop.f32.mrf.mxu0
        %v589 = vadd.f32 0.0, %v588
        %v590 = vpop.f32.mrf.mxu0
        %591 = vmatprep.mubr.bf16.mxu0 0
        %592 = vmatmul.mubr.bf16.gmra.mxu0 %v402
        %v593 = vpop.f32.mrf.mxu0
        %v594 = vadd.f32 0.0, %v593
        %v595 = vpop.f32.mrf.mxu0
        %v596 = vpop.f32.mrf.mxu0
        %v597 = vadd.f32 0.0, %v596
        %v598 = vpop.f32.mrf.mxu0
        %599 = vmatprep.mubr.bf16.mxu0 0
        %600 = vmatmul.mubr.bf16.gmra.mxu0 %v403
        %v601 = vpop.f32.mrf.mxu0
        %v602 = vadd.f32 0.0, %v601
        %v603 = vpop.f32.mrf.mxu0
        %v604 = vpop.f32.mrf.mxu0
        %v605 = vadd.f32 0.0, %v604
        %v606 = vpop.f32.mrf.mxu0
        %607 = vmatprep.mubr.bf16.mxu0 0
        %608 = vmatmul.mubr.bf16.gmra.mxu0 %v404
        %v609 = vpop.f32.mrf.mxu0
        %v610 = vadd.f32 0.0, %v609
        %v611 = vpop.f32.mrf.mxu0
        %v612 = vpop.f32.mrf.mxu0
        %v613 = vadd.f32 0.0, %v612
        %v614 = vpop.f32.mrf.mxu0
        %615 = vmatprep.mubr.bf16.mxu0 0
        %616 = vmatmul.mubr.bf16.gmra.mxu0 %v405
        %v617 = vpop.f32.mrf.mxu0
        %v618 = vadd.f32 0.0, %v617
        %v619 = vpop.f32.mrf.mxu0
        %v620 = vpop.f32.mrf.mxu0
        %v621 = vadd.f32 0.0, %v620
        %v622 = vpop.f32.mrf.mxu0
        %623 = vmatprep.mubr.bf16.mxu0 0
        %624 = vmatmul.mubr.bf16.gmra.mxu0 %v406
        %v625 = vpop.f32.mrf.mxu0
        %v626 = vadd.f32 0.0, %v625
        %v627 = vpop.f32.mrf.mxu0
        %v628 = vpop.f32.mrf.mxu0
        %v629 = vadd.f32 0.0, %v628
        %v630 = vpop.f32.mrf.mxu0
        %631 = vdwg.mxu0
        %v632 = vadd.f32 %v247, %v506
        %v633 = vadd.f32 %v248, %v509
        %v634 = vadd.f32 %v249, %v514
        %v635 = vadd.f32 %v250, %v517
        %v636 = vadd.f32 %v251, %v522
        %v637 = vadd.f32 %v252, %v525
        %v638 = vadd.f32 %v253, %v530
        %v639 = vadd.f32 %v254, %v533
        %v640 = vadd.f32 %v255, %v538
        %v641 = vadd.f32 %v256, %v541
        %v642 = vadd.f32 %v257, %v546
        %v643 = vadd.f32 %v258, %v549
        %v644 = vadd.f32 %v259, %v554
        %v645 = vadd.f32 %v260, %v557
        %v646 = vadd.f32 %v261, %v562
        %v647 = vadd.f32 %v262, %v565
        %v648 = vadd.f32 %v263, %v570
        %v649 = vadd.f32 %v264, %v573
        %v650 = vadd.f32 %v265, %v578
        %v651 = vadd.f32 %v266, %v581
        %v652 = vadd.f32 %v267, %v586
        %v653 = vadd.f32 %v268, %v589
        %v654 = vadd.f32 %v269, %v594
        %v655 = vadd.f32 %v270, %v597
        %v656 = vadd.f32 %v271, %v602
        %v657 = vadd.f32 %v272, %v605
        %v658 = vadd.f32 %v273, %v610
        %v659 = vadd.f32 %v274, %v613
        %v660 = vadd.f32 %v275, %v618
        %v661 = vadd.f32 %v276, %v621
        %v662 = vadd.f32 %v277, %v626
        %v663 = vadd.f32 %v278, %v629
        %664 = vst [vmem:[#allocation2] sm:$0xff] %v632
        %665 = vst [vmem:[#allocation2 + $0x8] sm:$0xff] %v633
        %666 = vst [vmem:[#allocation2 + $0x10] sm:$0xff] %v634
        %667 = vst [vmem:[#allocation2 + $0x18] sm:$0xff] %v635
        %668 = vst [vmem:[#allocation2 + $0x20] sm:$0xff] %v636
        %669 = vst [vmem:[#allocation2 + $0x28] sm:$0xff] %v637
        %670 = vst [vmem:[#allocation2 + $0x30] sm:$0xff] %v638
        %671 = vst [vmem:[#allocation2 + $0x38] sm:$0xff] %v639
        %672 = vst [vmem:[#allocation2 + $0x40] sm:$0xff] %v640
        %673 = vst [vmem:[#allocation2 + $0x48] sm:$0xff] %v641
        %674 = vst [vmem:[#allocation2 + $0x50] sm:$0xff] %v642
        %675 = vst [vmem:[#allocation2 + $0x58] sm:$0xff] %v643
        %676 = vst [vmem:[#allocation2 + $0x60] sm:$0xff] %v644
        %677 = vst [vmem:[#allocation2 + $0x68] sm:$0xff] %v645
        %678 = vst [vmem:[#allocation2 + $0x70] sm:$0xff] %v646
        %679 = vst [vmem:[#allocation2 + $0x78] sm:$0xff] %v647
        %680 = vst [vmem:[#allocation2 + $0x80] sm:$0xff] %v648
        %681 = vst [vmem:[#allocation2 + $0x88] sm:$0xff] %v649
        %682 = vst [vmem:[#allocation2 + $0x90] sm:$0xff] %v650
        %683 = vst [vmem:[#allocation2 + $0x98] sm:$0xff] %v651
        %684 = vst [vmem:[#allocation2 + $0xa0] sm:$0xff] %v652
        %685 = vst [vmem:[#allocation2 + $0xa8] sm:$0xff] %v653
        %686 = vst [vmem:[#allocation2 + $0xb0] sm:$0xff] %v654
        %687 = vst [vmem:[#allocation2 + $0xb8] sm:$0xff] %v655
        %688 = vst [vmem:[#allocation2 + $0xc0] sm:$0xff] %v656
        %689 = vst [vmem:[#allocation2 + $0xc8] sm:$0xff] %v657
        %690 = vst [vmem:[#allocation2 + $0xd0] sm:$0xff] %v658
        %691 = vst [vmem:[#allocation2 + $0xd8] sm:$0xff] %v659
        %692 = vst [vmem:[#allocation2 + $0xe0] sm:$0xff] %v660
        %693 = vst [vmem:[#allocation2 + $0xe8] sm:$0xff] %v661
        %694 = vst [vmem:[#allocation2 + $0xf0] sm:$0xff] %v662
        %695 = vst [vmem:[#allocation2 + $0xf8] sm:$0xff] %v663
        // Predicated region
        $region33: #{seq_conv_bn_relu_forward.3} parent=27 // pred_check
          %p696 = pneg %p211
        $region34: #{seq_conv_bn_relu_forward.3} parent=27 // pred_check_branch
          %698 = sbr.rel (%p696) target = $region36
        $region35: #{seq_conv_bn_relu_forward.3} parent=27 // pred_region
          %v699 = vld [vmem:[#allocation2] sm:$0xff]
          %v700 = vld [vmem:[#allocation2 + $0x8] sm:$0xff]
          %v701 = vld [vmem:[#allocation2 + $0x10] sm:$0xff]
          %v702 = vld [vmem:[#allocation2 + $0x18] sm:$0xff]
          %v703 = vld [vmem:[#allocation2 + $0x20] sm:$0xff]
          %v704 = vld [vmem:[#allocation2 + $0x28] sm:$0xff]
          %v705 = vld [vmem:[#allocation2 + $0x30] sm:$0xff]
          %v706 = vld [vmem:[#allocation2 + $0x38] sm:$0xff]
          %v707 = vld [vmem:[#allocation2 + $0x40] sm:$0xff]
          %v708 = vld [vmem:[#allocation2 + $0x48] sm:$0xff]
          %v709 = vld [vmem:[#allocation2 + $0x50] sm:$0xff]
          %v710 = vld [vmem:[#allocation2 + $0x58] sm:$0xff]
          %v711 = vld [vmem:[#allocation2 + $0x60] sm:$0xff]
          %v712 = vld [vmem:[#allocation2 + $0x68] sm:$0xff]
          %v713 = vld [vmem:[#allocation2 + $0x70] sm:$0xff]
          %v714 = vld [vmem:[#allocation2 + $0x78] sm:$0xff]
          %v715 = vld [vmem:[#allocation2 + $0x80] sm:$0xff]
          %v716 = vld [vmem:[#allocation2 + $0x88] sm:$0xff]
          %v717 = vld [vmem:[#allocation2 + $0x90] sm:$0xff]
          %v718 = vld [vmem:[#allocation2 + $0x98] sm:$0xff]
          %v719 = vld [vmem:[#allocation2 + $0xa0] sm:$0xff]
          %v720 = vld [vmem:[#allocation2 + $0xa8] sm:$0xff]
          %v721 = vld [vmem:[#allocation2 + $0xb0] sm:$0xff]
          %v722 = vld [vmem:[#allocation2 + $0xb8] sm:$0xff]
          %v723 = vld [vmem:[#allocation2 + $0xc0] sm:$0xff]
          %v724 = vld [vmem:[#allocation2 + $0xc8] sm:$0xff]
          %v725 = vld [vmem:[#allocation2 + $0xd0] sm:$0xff]
          %v726 = vld [vmem:[#allocation2 + $0xd8] sm:$0xff]
          %v727 = vld [vmem:[#allocation2 + $0xe0] sm:$0xff]
          %v728 = vld [vmem:[#allocation2 + $0xe8] sm:$0xff]
          %v729 = vld [vmem:[#allocation2 + $0xf0] sm:$0xff]
          %v730 = vld [vmem:[#allocation2 + $0xf8] sm:$0xff]
          %v731 = vmax.f32 %v699, 0.0
          %v732 = vmax.f32 %v700, 0.0
          %v733 = vmax.f32 %v701, 0.0
          %v734 = vmax.f32 %v702, 0.0
          %v735 = vmax.f32 %v703, 0.0
          %v736 = vmax.f32 %v704, 0.0
          %v737 = vmax.f32 %v705, 0.0
          %v738 = vmax.f32 %v706, 0.0
          %v739 = vmax.f32 %v707, 0.0
          %v740 = vmax.f32 %v708, 0.0
          %v741 = vmax.f32 %v709, 0.0
          %v742 = vmax.f32 %v710, 0.0
          %v743 = vmax.f32 %v711, 0.0
          %v744 = vmax.f32 %v712, 0.0
          %v745 = vmax.f32 %v713, 0.0
          %v746 = vmax.f32 %v714, 0.0
          %v747 = vmax.f32 %v715, 0.0
          %v748 = vmax.f32 %v716, 0.0
          %v749 = vmax.f32 %v717, 0.0
          %v750 = vmax.f32 %v718, 0.0
          %v751 = vmax.f32 %v719, 0.0
          %v752 = vmax.f32 %v720, 0.0
          %v753 = vmax.f32 %v721, 0.0
          %v754 = vmax.f32 %v722, 0.0
          %v755 = vmax.f32 %v723, 0.0
          %v756 = vmax.f32 %v724, 0.0
          %v757 = vmax.f32 %v725, 0.0
          %v758 = vmax.f32 %v726, 0.0
          %v759 = vmax.f32 %v727, 0.0
          %v760 = vmax.f32 %v728, 0.0
          %v761 = vmax.f32 %v729, 0.0
          %v762 = vmax.f32 %v730, 0.0
          %763 = vst [vmem:[%s190] sm:$0xff] %v731
          %764 = vst [vmem:[%s190 + $0x8] sm:$0xff] %v732
          %765 = vst [vmem:[%s190 + $0x10] sm:$0xff] %v733
          %766 = vst [vmem:[%s190 + $0x18] sm:$0xff] %v734
          %767 = vst [vmem:[%s190 + $0x20] sm:$0xff] %v735
          %768 = vst [vmem:[%s190 + $0x28] sm:$0xff] %v736
          %769 = vst [vmem:[%s190 + $0x30] sm:$0xff] %v737
          %770 = vst [vmem:[%s190 + $0x38] sm:$0xff] %v738
          %771 = vst [vmem:[%s190 + $0x40] sm:$0xff] %v739
          %772 = vst [vmem:[%s190 + $0x48] sm:$0xff] %v740
          %773 = vst [vmem:[%s190 + $0x50] sm:$0xff] %v741
          %774 = vst [vmem:[%s190 + $0x58] sm:$0xff] %v742
          %775 = vst [vmem:[%s190 + $0x60] sm:$0xff] %v743
          %776 = vst [vmem:[%s190 + $0x68] sm:$0xff] %v744
          %777 = vst [vmem:[%s190 + $0x70] sm:$0xff] %v745
          %778 = vst [vmem:[%s190 + $0x78] sm:$0xff] %v746
          %779 = vst [vmem:[%s190 + $0x80] sm:$0xff] %v747
          %780 = vst [vmem:[%s190 + $0x88] sm:$0xff] %v748
          %781 = vst [vmem:[%s190 + $0x90] sm:$0xff] %v749
          %782 = vst [vmem:[%s190 + $0x98] sm:$0xff] %v750
          %783 = vst [vmem:[%s190 + $0xa0] sm:$0xff] %v751
          %784 = vst [vmem:[%s190 + $0xa8] sm:$0xff] %v752
          %785 = vst [vmem:[%s190 + $0xb0] sm:$0xff] %v753
          %786 = vst [vmem:[%s190 + $0xb8] sm:$0xff] %v754
          %787 = vst [vmem:[%s190 + $0xc0] sm:$0xff] %v755
          %788 = vst [vmem:[%s190 + $0xc8] sm:$0xff] %v756
          %789 = vst [vmem:[%s190 + $0xd0] sm:$0xff] %v757
          %790 = vst [vmem:[%s190 + $0xd8] sm:$0xff] %v758
          %791 = vst [vmem:[%s190 + $0xe0] sm:$0xff] %v759
          %792 = vst [vmem:[%s190 + $0xe8] sm:$0xff] %v760
          %793 = vst [vmem:[%s190 + $0xf0] sm:$0xff] %v761
          %794 = vst [vmem:[%s190 + $0xf8] sm:$0xff] %v762
        $region36: #{seq_conv_bn_relu_forward.3} parent=27 // pred_fallthru
          _
        %s795 = sand.u32 %s101, 1
        %s796 = scalar_lea.sflag [#allocation4], %s795
        %s797 = sand.u32 %s101, 1
        %s798 = smul.addr %s797, 256
        %s799 = scalar_lea.vmem [#allocation3], %s798
        // Predicated region
        $region37: #{seq_conv_bn_relu_forward.3} parent=27 // pred_check
          %p800 = pneg %p111
        $region38: #{seq_conv_bn_relu_forward.3} parent=27 // pred_check_branch
          %802 = sbr.rel (%p800) target = $region40
        $region39: #{seq_conv_bn_relu_forward.3} parent=27 // pred_region
          %s803 = smul.u32 32, %s21
          %s805 = ssub.s32 4096, 4096
          %806 = vsyncadd %s796, %s805
          %s807 = sadd.s32 %s22, %s803
          %s808 = smul.addr %s807, 128
          %s809 = scalar_lea.hbm %s2, %s808
          %s810 = sshll.u32 %s799, 4
          %s811 = int_to_ptr.vmem [resolvable:$true] %s810
          %816 = dma.vmem_to_hbm [thread:$0]  %s811, 4096, %s809, %s796, 128, 128, 8
        $region40: #{seq_conv_bn_relu_forward.3} parent=27 // pred_fallthru
          _
      $region28: #{seq_conv_bn_relu_forward.3} parent=5 // pred_fallthru
        _
      %p817 = scmp.le.s32.totalorder 2, %s11
      // Predicated region
      $region41: #{seq_conv_bn_relu_forward.3} parent=5 // pred_check
        %p818 = pneg %p817
      $region42: #{seq_conv_bn_relu_forward.3} parent=5 // pred_check_branch
        %820 = sbr.rel (%p818) target = $region44
      $region43: #{seq_conv_bn_relu_forward.3} parent=5 // pred_region
        %s821 = ssub.s32 %s11, 2
        // Predicated region
        $region45: #{seq_conv_bn_relu_forward.3} parent=43 // pred_check
          %p822 = pneg %p117
        $region46: #{seq_conv_bn_relu_forward.3} parent=43 // pred_check_branch
          %824 = sbr.rel (%p822) target = $region48
        $region47: #{seq_conv_bn_relu_forward.3} parent=43 // pred_region
          %s825 = sand.u32 %s102, 1
          %s826 = scalar_lea.sflag [#allocation4], %s825
          %s827 = sand.u32 %s102, 1
          %s828 = smul.addr %s827, 256
          %s829 = scalar_lea.vmem [#allocation3], %s828
          %830 = dma.done %s826, 4096
        $region48: #{seq_conv_bn_relu_forward.3} parent=43 // pred_fallthru
          _
      $region44: #{seq_conv_bn_relu_forward.3} parent=5 // pred_fallthru
        _
    $region6: #{seq_conv_bn_relu_forward.3} parent=1 // loop_footer
      %s15 = sadd.s32 1, %s11
    $region7: #{seq_conv_bn_relu_forward.3} parent=1 // loop_footer_branch
      %10 = sbr.rel target = $region3
    $region8: #{seq_conv_bn_relu_forward.3} parent=1 // loop_exit
      _
    %831 = vsyncpa [#allocation4], 1
    %s832 = scalar_lea.sflag [#allocation4], 1
    %833 = vsyncpa %s832, 1

// kernel: seq_conv_bn_relu_forward.2
$region0: #{seq_conv_bn_relu_forward.2}
  #allocation0 [shape = 'u32[]', space=smem, size = 0x4, offset = 0x4, fixed_abs, tag = 'smem constant byte address 0x4 - core index']
  #allocation1 [shape = 'u32[144,128]{1,0:T(1,128)}', space=vmem, size = 0x12000, scoped, tag = 'internal scratch']
  %s0 = inlined_call_operand.vmem [shape: f32[2,18,18,128], index: 0, kind: input, shape index: {}]
  %s1 = inlined_call_operand.vmem [shape: f32[16,128], index: 1, kind: input, shape index: {}]
  %s2 = inlined_call_operand.vmem [shape: bf16[2,16,16,128], index: 2, kind: output, shape index: {}]
  %s3 = sld [smem:[#allocation0]]
  $region41: #{seq_conv_bn_relu_forward.2} parent=0
    _
  %s5 = ssub.s32 1, %s3
  %s6 = scalar_select 0, %s5, %s3
  loop: start=0, step=1, limit=4
  $region2: #{seq_conv_bn_relu_forward.2} parent=0 // loop_pre_header
    _
  $region3: #{seq_conv_bn_relu_forward.2} parent=0 // loop_header
    %s8 = sphi 0, %s12
    %p9 = scmp.ge.s32.totalorder %s8, 4
    %s15 = sphi 0, %s27
    %s16 = sphi 0, %s23
    %s17 = sphi 0, %s15
    %s18 = sphi 0, %s16
    %s19 = sphi 0, %s17
    %s20 = sphi 0, %s18
    %s32 = sphi 0, %s34
    %s35 = sphi 0, %s32
    %s36 = sphi 0, %s35
    %s52 = sphi 0, %s36
    %s58 = sphi 0, %s60
    %s61 = sphi 0, %s58
    %s62 = sphi 0, %s61
    %s78 = sphi 0, %s62
    %s86 = sphi 0, %s88
    %s89 = sphi 0, %s86
    %s90 = sphi 0, %s89
    %s106 = sphi 0, %s90
  $region4: #{seq_conv_bn_relu_forward.2} parent=0 // loop_header_branch
    %11 = sbr.rel (%p9) target = $region8
  $region5: #{seq_conv_bn_relu_forward.2} parent=0 // loop_body
    %s13 = ssub.s32 %s8, 1
    %s14 = ssub.s32 %s8, 2
    %s21 = sadd.s32 1, %s16
    %p22 = scmp.ge.s32.totalorder %s21, 1
    %s23 = scalar_select %p22, 0, %s21
    %s24 = sadd.s32 1, %s15
    %s25 = scalar_select %p22, %s24, %s15
    %p26 = scmp.ge.s32.totalorder %s25, 2
    %s27 = scalar_select %p26, 0, %s25
    %s28 = ssub.s32 %s15, %s27
    %s29 = ssub.s32 %s16, %s23
    %s30 = sor.u32 %s28, %s29
    %p31 = scmp.eq.s32.totalorder %s30, 0
    %s33 = sadd.s32 %s32, 1
    %s34 = scalar_select %p31, %s32, %s33
    %p37 = pneg %p31
    %p38 = scmp.eq.s32.totalorder %s8, 1
    %p39 = por %p37, %p38
    %p40 = scmp.ne.s32.totalorder %s32, %s35
    %p41 = scmp.eq.s32.totalorder %s8, 0
    %p42 = por %p40, %p41
    %p43 = scmp.ne.s32.totalorder %s32, %s35
    %p44 = scmp.eq.s32.totalorder %s13, 1
    %p45 = por %p43, %p44
    %p46 = scmp.ne.s32.totalorder %s35, %s36
    %p47 = scmp.eq.s32.totalorder %s13, 0
    %p48 = por %p46, %p47
    %p49 = scmp.ne.s32.totalorder %s35, %s36
    %p50 = scmp.eq.s32.totalorder %s14, 1
    %p51 = por %p49, %p50
    %p53 = scmp.ne.s32.totalorder %s36, %s52
    %p54 = scmp.eq.s32.totalorder %s14, 0
    %p55 = por %p53, %p54
    %s56 = ssub.s32 %s16, %s23
    %p57 = scmp.eq.s32.totalorder %s56, 0
    %s59 = sadd.s32 %s58, 1
    %s60 = scalar_select %p57, %s58, %s59
    %p63 = pneg %p57
    %p64 = scmp.eq.s32.totalorder %s8, 1
    %p65 = por %p63, %p64
    %p66 = scmp.ne.s32.totalorder %s58, %s61
    %p67 = scmp.eq.s32.totalorder %s8, 0
    %p68 = por %p66, %p67
    %p69 = scmp.ne.s32.totalorder %s58, %s61
    %p70 = scmp.eq.s32.totalorder %s13, 1
    %p71 = por %p69, %p70
    %p72 = scmp.ne.s32.totalorder %s61, %s62
    %p73 = scmp.eq.s32.totalorder %s13, 0
    %p74 = por %p72, %p73
    %p75 = scmp.ne.s32.totalorder %s61, %s62
    %p76 = scmp.eq.s32.totalorder %s14, 1
    %p77 = por %p75, %p76
    %p79 = scmp.ne.s32.totalorder %s62, %s78
    %p80 = scmp.eq.s32.totalorder %s14, 0
    %p81 = por %p79, %p80
    %s82 = ssub.s32 %s15, %s27
    %s83 = ssub.s32 %s16, %s23
    %s84 = sor.u32 %s82, %s83
    %p85 = scmp.eq.s32.totalorder %s84, 0
    %s87 = sadd.s32 %s86, 1
    %s88 = scalar_select %p85, %s86, %s87
    %p91 = pneg %p85
    %p92 = scmp.eq.s32.totalorder %s8, 1
    %p93 = por %p91, %p92
    %p94 = scmp.ne.s32.totalorder %s86, %s89
    %p95 = scmp.eq.s32.totalorder %s8, 0
    %p96 = por %p94, %p95
    %p97 = scmp.ne.s32.totalorder %s86, %s89
    %p98 = scmp.eq.s32.totalorder %s13, 1
    %p99 = por %p97, %p98
    %p100 = scmp.ne.s32.totalorder %s89, %s90
    %p101 = scmp.eq.s32.totalorder %s13, 0
    %p102 = por %p100, %p101
    %p103 = scmp.ne.s32.totalorder %s89, %s90
    %p104 = scmp.eq.s32.totalorder %s14, 1
    %p105 = por %p103, %p104
    %p107 = scmp.ne.s32.totalorder %s90, %s106
    %p108 = scmp.eq.s32.totalorder %s14, 0
    %p109 = por %p107, %p108
    %p110 = scmp.le.s32.totalorder 1, %s8
    %p111 = scmp.lt.s32.totalorder %s8, 3
    %p112 = pnand %p110, %p111
    %p113 = pneg %p112
    // Predicated region
    $region9: #{seq_conv_bn_relu_forward.2} parent=5 // pred_check
      _
    $region10: #{seq_conv_bn_relu_forward.2} parent=5 // pred_check_branch
      %115 = sbr.rel (%p112) target = $region12
    $region11: #{seq_conv_bn_relu_forward.2} parent=5 // pred_region
      %s116 = ssub.s32 %s8, 1
      // Predicated region
      $region13: #{seq_conv_bn_relu_forward.2} parent=11 // pred_check
        %p117 = pneg %p74
      $region14: #{seq_conv_bn_relu_forward.2} parent=11 // pred_check_branch
        %119 = sbr.rel (%p117) target = $region16
      $region15: #{seq_conv_bn_relu_forward.2} parent=11 // pred_region
        %p120 = scmp.lt.s32.totalorder %s18, 0
        %s121 = scalar_select %p120, %s18, 0
        %s122 = smul.addr %s121, 8
        %s123 = scalar_lea.vmem %s1, %s122
      $region16: #{seq_conv_bn_relu_forward.2} parent=11 // pred_fallthru
        _
    $region12: #{seq_conv_bn_relu_forward.2} parent=5 // pred_fallthru
      _
    %p124 = scmp.lt.s32.totalorder %s8, 2
    // Predicated region
    $region17: #{seq_conv_bn_relu_forward.2} parent=5 // pred_check
      %p125 = pneg %p124
    $region18: #{seq_conv_bn_relu_forward.2} parent=5 // pred_check_branch
      %127 = sbr.rel (%p125) target = $region20
    $region19: #{seq_conv_bn_relu_forward.2} parent=5 // pred_region
      // Predicated region
      $region21: #{seq_conv_bn_relu_forward.2} parent=19 // pred_check
        %p128 = pneg %p42
      $region22: #{seq_conv_bn_relu_forward.2} parent=19 // pred_check_branch
        %130 = sbr.rel (%p128) target = $region24
      $region23: #{seq_conv_bn_relu_forward.2} parent=19 // pred_region
        %p131 = scmp.lt.s32.totalorder %s15, 1
        %s132 = scalar_select %p131, %s15, 1
        %p133 = scmp.lt.s32.totalorder %s16, 0
        %s134 = scalar_select %p133, %s16, 0
        %s135 = smul.addr %s132, 54
        %s136 = sadd.s32 %s134, %s135
        %s137 = smul.addr %s136, 8
        %s138 = scalar_lea.vmem %s0, %s137
      $region24: #{seq_conv_bn_relu_forward.2} parent=19 // pred_fallthru
        _
    $region20: #{seq_conv_bn_relu_forward.2} parent=5 // pred_fallthru
      _
    %p139 = scmp.le.s32.totalorder 1, %s8
    %p140 = scmp.lt.s32.totalorder %s8, 3
    %p141 = pnand %p139, %p140
    %p142 = pneg %p141
    // Predicated region
    $region25: #{seq_conv_bn_relu_forward.2} parent=5 // pred_check
      _
    $region26: #{seq_conv_bn_relu_forward.2} parent=5 // pred_check_branch
      %144 = sbr.rel (%p141) target = $region28
    $region27: #{seq_conv_bn_relu_forward.2} parent=5 // pred_region
      %s145 = ssub.s32 %s8, 1
      %p146 = scmp.lt.s32.totalorder %s17, 1
      %s147 = scalar_select %p146, %s17, 1
      %p148 = scmp.lt.s32.totalorder %s18, 0
      %s149 = scalar_select %p148, %s18, 0
      %s150 = smul.addr %s147, 54
      %s151 = sadd.s32 %s149, %s150
      %s152 = smul.addr %s151, 8
      %s153 = scalar_lea.vmem %s0, %s152
      %p154 = pneg %p48
      %p155 = pneg %p45
      %p156 = scmp.lt.s32.totalorder %s18, 0
      %s157 = scalar_select %p156, %s18, 0
      %s158 = smul.addr %s157, 8
      %s159 = scalar_lea.vmem %s1, %s158
      %p160 = pneg %p74
      %p161 = pneg %p71
      %p162 = pneg %p102
      %p163 = pneg %p99
      %p164 = scmp.lt.s32.totalorder %s17, 1
      %s165 = scalar_select %p164, %s17, 1
      %p166 = scmp.lt.s32.totalorder %s18, 0
      %s167 = scalar_select %p166, %s18, 0
      %s168 = smul.addr %s165, 32
      %s169 = sadd.s32 %s167, %s168
      %s170 = smul.addr %s169, 4
      %s171 = scalar_lea.vmem %s2, %s170
      %p172 = scmp.lt.s32.totalorder %s17, 1
      %s173 = scalar_select %p172, %s17, 1
      %p174 = scmp.lt.s32.totalorder %s18, 0
      %s175 = scalar_select %p174, %s18, 0
      %s176 = smul.addr %s173, 54
      %s177 = sadd.s32 %s175, %s176
      %s178 = smul.addr %s177, 8
      %s179 = scalar_lea.vmem %s0, %s178
      %p180 = scmp.lt.s32.totalorder %s18, 0
      %s181 = scalar_select %p180, %s18, 0
      %s182 = smul.addr %s181, 8
      %s183 = scalar_lea.vmem %s1, %s182
      %p184 = scmp.lt.s32.totalorder %s17, 1
      %s185 = scalar_select %p184, %s17, 1
      %p186 = scmp.lt.s32.totalorder %s18, 0
      %s187 = scalar_select %p186, %s18, 0
      %s188 = smul.addr %s185, 32
      %s189 = sadd.s32 %s187, %s188
      %s190 = smul.addr %s189, 4
      %s191 = scalar_lea.vmem %s2, %s190
      %v192 = vld [vmem:[%s179] sm:$0xff]
      %v193 = vld [vmem:[%s179 + $0x8] sm:$0xff]
      %v194 = vld [vmem:[%s179 + $0x18] sm:$0xff]
      %v195 = vld [vmem:[%s179 + $0x20] sm:$0xff]
      %v196 = vld [vmem:[%s179 + $0x30] sm:$0xff]
      %v197 = vld [vmem:[%s179 + $0x38] sm:$0xff]
      %v198 = vld [vmem:[%s179 + $0x48] sm:$0xff]
      %v199 = vld [vmem:[%s179 + $0x50] sm:$0xff]
      %v200 = vld [vmem:[%s179 + $0x60] sm:$0xff]
      %v201 = vld [vmem:[%s179 + $0x68] sm:$0xff]
      %v202 = vld [vmem:[%s179 + $0x78] sm:$0xff]
      %v203 = vld [vmem:[%s179 + $0x80] sm:$0xff]
      %v204 = vld [vmem:[%s179 + $0x90] sm:$0xff]
      %v205 = vld [vmem:[%s179 + $0x98] sm:$0xff]
      %v206 = vld [vmem:[%s179 + $0xa8] sm:$0xff]
      %v207 = vld [vmem:[%s179 + $0xb0] sm:$0xff]
      %v208 = vld [vmem:[%s179 + $0xc0] sm:$0xff]
      %v209 = vld [vmem:[%s179 + $0xc8] sm:$0xff]
      %v210 = vld [vmem:[%s179 + $0xd8] sm:$0xff]
      %v211 = vld [vmem:[%s179 + $0xe0] sm:$0xff]
      %v212 = vld [vmem:[%s179 + $0xf0] sm:$0xff]
      %v213 = vld [vmem:[%s179 + $0xf8] sm:$0xff]
      %v214 = vld [vmem:[%s179 + $0x108] sm:$0xff]
      %v215 = vld [vmem:[%s179 + $0x110] sm:$0xff]
      %v216 = vld [vmem:[%s179 + $0x120] sm:$0xff]
      %v217 = vld [vmem:[%s179 + $0x128] sm:$0xff]
      %v218 = vld [vmem:[%s179 + $0x138] sm:$0xff]
      %v219 = vld [vmem:[%s179 + $0x140] sm:$0xff]
      %v220 = vld [vmem:[%s179 + $0x150] sm:$0xff]
      %v221 = vld [vmem:[%s179 + $0x158] sm:$0xff]
      %v222 = vld [vmem:[%s179 + $0x168] sm:$0xff]
      %v223 = vld [vmem:[%s179 + $0x170] sm:$0xff]
      %v224 = vld [vmem:[%s183] sm:$0x1]
      %v225 = vlaneseq
      %v226 = vshrl.u32 %v225, 7
      %v227 = vsub.s32 0, %v226
      %v228 = vrot.slane %v224, %v227
      %v229 = vmul.f32 %v192, %v228
      %v230 = vmul.f32 %v193, %v228
      %v231 = vmul.f32 %v194, %v228
      %v232 = vmul.f32 %v195, %v228
      %v233 = vmul.f32 %v196, %v228
      %v234 = vmul.f32 %v197, %v228
      %v235 = vmul.f32 %v198, %v228
      %v236 = vmul.f32 %v199, %v228
      %v237 = vmul.f32 %v200, %v228
      %v238 = vmul.f32 %v201, %v228
      %v239 = vmul.f32 %v202, %v228
      %v240 = vmul.f32 %v203, %v228
      %v241 = vmul.f32 %v204, %v228
      %v242 = vmul.f32 %v205, %v228
      %v243 = vmul.f32 %v206, %v228
      %v244 = vmul.f32 %v207, %v228
      %v245 = vmul.f32 %v208, %v228
      %v246 = vmul.f32 %v209, %v228
      %v247 = vmul.f32 %v210, %v228
      %v248 = vmul.f32 %v211, %v228
      %v249 = vmul.f32 %v212, %v228
      %v250 = vmul.f32 %v213, %v228
      %v251 = vmul.f32 %v214, %v228
      %v252 = vmul.f32 %v215, %v228
      %v253 = vmul.f32 %v216, %v228
      %v254 = vmul.f32 %v217, %v228
      %v255 = vmul.f32 %v218, %v228
      %v256 = vmul.f32 %v219, %v228
      %v257 = vmul.f32 %v220, %v228
      %v258 = vmul.f32 %v221, %v228
      %v259 = vmul.f32 %v222, %v228
      %v260 = vmul.f32 %v223, %v228
      %v261 = vadd.f32 %v229, 0.0
      %v262 = vadd.f32 %v230, 0.0
      %v263 = vadd.f32 %v231, 0.0
      %v264 = vadd.f32 %v232, 0.0
      %v265 = vadd.f32 %v233, 0.0
      %v266 = vadd.f32 %v234, 0.0
      %v267 = vadd.f32 %v235, 0.0
      %v268 = vadd.f32 %v236, 0.0
      %v269 = vadd.f32 %v237, 0.0
      %v270 = vadd.f32 %v238, 0.0
      %v271 = vadd.f32 %v239, 0.0
      %v272 = vadd.f32 %v240, 0.0
      %v273 = vadd.f32 %v241, 0.0
      %v274 = vadd.f32 %v242, 0.0
      %v275 = vadd.f32 %v243, 0.0
      %v276 = vadd.f32 %v244, 0.0
      %v277 = vadd.f32 %v245, 0.0
      %v278 = vadd.f32 %v246, 0.0
      %v279 = vadd.f32 %v247, 0.0
      %v280 = vadd.f32 %v248, 0.0
      %v281 = vadd.f32 %v249, 0.0
      %v282 = vadd.f32 %v250, 0.0
      %v283 = vadd.f32 %v251, 0.0
      %v284 = vadd.f32 %v252, 0.0
      %v285 = vadd.f32 %v253, 0.0
      %v286 = vadd.f32 %v254, 0.0
      %v287 = vadd.f32 %v255, 0.0
      %v288 = vadd.f32 %v256, 0.0
      %v289 = vadd.f32 %v257, 0.0
      %v290 = vadd.f32 %v258, 0.0
      %v291 = vadd.f32 %v259, 0.0
      %v292 = vadd.f32 %v260, 0.0
      %v293 = vld [vmem:[%s179 + $0x1] sm:$0xff]
      %v294 = vld [vmem:[%s179 + $0x9] sm:$0xff]
      %v295 = vld [vmem:[%s179 + $0x19] sm:$0xff]
      %v296 = vld [vmem:[%s179 + $0x21] sm:$0xff]
      %v297 = vld [vmem:[%s179 + $0x31] sm:$0xff]
      %v298 = vld [vmem:[%s179 + $0x39] sm:$0xff]
      %v299 = vld [vmem:[%s179 + $0x49] sm:$0xff]
      %v300 = vld [vmem:[%s179 + $0x51] sm:$0xff]
      %v301 = vld [vmem:[%s179 + $0x61] sm:$0xff]
      %v302 = vld [vmem:[%s179 + $0x69] sm:$0xff]
      %v303 = vld [vmem:[%s179 + $0x79] sm:$0xff]
      %v304 = vld [vmem:[%s179 + $0x81] sm:$0xff]
      %v305 = vld [vmem:[%s179 + $0x91] sm:$0xff]
      %v306 = vld [vmem:[%s179 + $0x99] sm:$0xff]
      %v307 = vld [vmem:[%s179 + $0xa9] sm:$0xff]
      %v308 = vld [vmem:[%s179 + $0xb1] sm:$0xff]
      %v309 = vld [vmem:[%s179 + $0xc1] sm:$0xff]
      %v310 = vld [vmem:[%s179 + $0xc9] sm:$0xff]
      %v311 = vld [vmem:[%s179 + $0xd9] sm:$0xff]
      %v312 = vld [vmem:[%s179 + $0xe1] sm:$0xff]
      %v313 = vld [vmem:[%s179 + $0xf1] sm:$0xff]
      %v314 = vld [vmem:[%s179 + $0xf9] sm:$0xff]
      %v315 = vld [vmem:[%s179 + $0x109] sm:$0xff]
      %v316 = vld [vmem:[%s179 + $0x111] sm:$0xff]
      %v317 = vld [vmem:[%s179 + $0x121] sm:$0xff]
      %v318 = vld [vmem:[%s179 + $0x129] sm:$0xff]
      %v319 = vld [vmem:[%s179 + $0x139] sm:$0xff]
      %v320 = vld [vmem:[%s179 + $0x141] sm:$0xff]
      %v321 = vld [vmem:[%s179 + $0x151] sm:$0xff]
      %v322 = vld [vmem:[%s179 + $0x159] sm:$0xff]
      %v323 = vld [vmem:[%s179 + $0x169] sm:$0xff]
      %v324 = vld [vmem:[%s179 + $0x171] sm:$0xff]
      %v325 = vld [vmem:[%s183 + $0x1] sm:$0x1]
      %v326 = vlaneseq
      %v327 = vshrl.u32 %v326, 7
      %v328 = vsub.s32 0, %v327
      %v329 = vrot.slane %v325, %v328
      %v330 = vmul.f32 %v293, %v329
      %v331 = vmul.f32 %v294, %v329
      %v332 = vmul.f32 %v295, %v329
      %v333 = vmul.f32 %v296, %v329
      %v334 = vmul.f32 %v297, %v329
      %v335 = vmul.f32 %v298, %v329
      %v336 = vmul.f32 %v299, %v329
      %v337 = vmul.f32 %v300, %v329
      %v338 = vmul.f32 %v301, %v329
      %v339 = vmul.f32 %v302, %v329
      %v340 = vmul.f32 %v303, %v329
      %v341 = vmul.f32 %v304, %v329
      %v342 = vmul.f32 %v305, %v329
      %v343 = vmul.f32 %v306, %v329
      %v344 = vmul.f32 %v307, %v329
      %v345 = vmul.f32 %v308, %v329
      %v346 = vmul.f32 %v309, %v329
      %v347 = vmul.f32 %v310, %v329
      %v348 = vmul.f32 %v311, %v329
      %v349 = vmul.f32 %v312, %v329
      %v350 = vmul.f32 %v313, %v329
      %v351 = vmul.f32 %v314, %v329
      %v352 = vmul.f32 %v315, %v329
      %v353 = vmul.f32 %v316, %v329
      %v354 = vmul.f32 %v317, %v329
      %v355 = vmul.f32 %v318, %v329
      %v356 = vmul.f32 %v319, %v329
      %v357 = vmul.f32 %v320, %v329
      %v358 = vmul.f32 %v321, %v329
      %v359 = vmul.f32 %v322, %v329
      %v360 = vmul.f32 %v323, %v329
      %v361 = vmul.f32 %v324, %v329
      %v362 = vadd.f32 %v261, %v330
      %v363 = vadd.f32 %v262, %v331
      %v364 = vadd.f32 %v263, %v332
      %v365 = vadd.f32 %v264, %v333
      %v366 = vadd.f32 %v265, %v334
      %v367 = vadd.f32 %v266, %v335
      %v368 = vadd.f32 %v267, %v336
      %v369 = vadd.f32 %v268, %v337
      %v370 = vadd.f32 %v269, %v338
      %v371 = vadd.f32 %v270, %v339
      %v372 = vadd.f32 %v271, %v340
      %v373 = vadd.f32 %v272, %v341
      %v374 = vadd.f32 %v273, %v342
      %v375 = vadd.f32 %v274, %v343
      %v376 = vadd.f32 %v275, %v344
      %v377 = vadd.f32 %v276, %v345
      %v378 = vadd.f32 %v277, %v346
      %v379 = vadd.f32 %v278, %v347
      %v380 = vadd.f32 %v279, %v348
      %v381 = vadd.f32 %v280, %v349
      %v382 = vadd.f32 %v281, %v350
      %v383 = vadd.f32 %v282, %v351
      %v384 = vadd.f32 %v283, %v352
      %v385 = vadd.f32 %v284, %v353
      %v386 = vadd.f32 %v285, %v354
      %v387 = vadd.f32 %v286, %v355
      %v388 = vadd.f32 %v287, %v356
      %v389 = vadd.f32 %v288, %v357
      %v390 = vadd.f32 %v289, %v358
      %v391 = vadd.f32 %v290, %v359
      %v392 = vadd.f32 %v291, %v360
      %v393 = vadd.f32 %v292, %v361
      %v394 = vld [vmem:[%s179 + $0x2] sm:$0xff]
      %v395 = vld [vmem:[%s179 + $0xa] sm:$0xff]
      %v396 = vld [vmem:[%s179 + $0x1a] sm:$0xff]
      %v397 = vld [vmem:[%s179 + $0x22] sm:$0xff]
      %v398 = vld [vmem:[%s179 + $0x32] sm:$0xff]
      %v399 = vld [vmem:[%s179 + $0x3a] sm:$0xff]
      %v400 = vld [vmem:[%s179 + $0x4a] sm:$0xff]
      %v401 = vld [vmem:[%s179 + $0x52] sm:$0xff]
      %v402 = vld [vmem:[%s179 + $0x62] sm:$0xff]
      %v403 = vld [vmem:[%s179 + $0x6a] sm:$0xff]
      %v404 = vld [vmem:[%s179 + $0x7a] sm:$0xff]
      %v405 = vld [vmem:[%s179 + $0x82] sm:$0xff]
      %v406 = vld [vmem:[%s179 + $0x92] sm:$0xff]
      %v407 = vld [vmem:[%s179 + $0x9a] sm:$0xff]
      %v408 = vld [vmem:[%s179 + $0xaa] sm:$0xff]
      %v409 = vld [vmem:[%s179 + $0xb2] sm:$0xff]
      %v410 = vld [vmem:[%s179 + $0xc2] sm:$0xff]
      %v411 = vld [vmem:[%s179 + $0xca] sm:$0xff]
      %v412 = vld [vmem:[%s179 + $0xda] sm:$0xff]
      %v413 = vld [vmem:[%s179 + $0xe2] sm:$0xff]
      %v414 = vld [vmem:[%s179 + $0xf2] sm:$0xff]
      %v415 = vld [vmem:[%s179 + $0xfa] sm:$0xff]
      %v416 = vld [vmem:[%s179 + $0x10a] sm:$0xff]
      %v417 = vld [vmem:[%s179 + $0x112] sm:$0xff]
      %v418 = vld [vmem:[%s179 + $0x122] sm:$0xff]
      %v419 = vld [vmem:[%s179 + $0x12a] sm:$0xff]
      %v420 = vld [vmem:[%s179 + $0x13a] sm:$0xff]
      %v421 = vld [vmem:[%s179 + $0x142] sm:$0xff]
      %v422 = vld [vmem:[%s179 + $0x152] sm:$0xff]
      %v423 = vld [vmem:[%s179 + $0x15a] sm:$0xff]
      %v424 = vld [vmem:[%s179 + $0x16a] sm:$0xff]
      %v425 = vld [vmem:[%s179 + $0x172] sm:$0xff]
      %v426 = vld [vmem:[%s183 + $0x2] sm:$0x1]
      %v427 = vlaneseq
      %v428 = vshrl.u32 %v427, 7
      %v429 = vsub.s32 0, %v428
      %v430 = vrot.slane %v426, %v429
      %v431 = vmul.f32 %v394, %v430
      %v432 = vmul.f32 %v395, %v430
      %v433 = vmul.f32 %v396, %v430
      %v434 = vmul.f32 %v397, %v430
      %v435 = vmul.f32 %v398, %v430
      %v436 = vmul.f32 %v399, %v430
      %v437 = vmul.f32 %v400, %v430
      %v438 = vmul.f32 %v401, %v430
      %v439 = vmul.f32 %v402, %v430
      %v440 = vmul.f32 %v403, %v430
      %v441 = vmul.f32 %v404, %v430
      %v442 = vmul.f32 %v405, %v430
      %v443 = vmul.f32 %v406, %v430
      %v444 = vmul.f32 %v407, %v430
      %v445 = vmul.f32 %v408, %v430
      %v446 = vmul.f32 %v409, %v430
      %v447 = vmul.f32 %v410, %v430
      %v448 = vmul.f32 %v411, %v430
      %v449 = vmul.f32 %v412, %v430
      %v450 = vmul.f32 %v413, %v430
      %v451 = vmul.f32 %v414, %v430
      %v452 = vmul.f32 %v415, %v430
      %v453 = vmul.f32 %v416, %v430
      %v454 = vmul.f32 %v417, %v430
      %v455 = vmul.f32 %v418, %v430
      %v456 = vmul.f32 %v419, %v430
      %v457 = vmul.f32 %v420, %v430
      %v458 = vmul.f32 %v421, %v430
      %v459 = vmul.f32 %v422, %v430
      %v460 = vmul.f32 %v423, %v430
      %v461 = vmul.f32 %v424, %v430
      %v462 = vmul.f32 %v425, %v430
      %v463 = vadd.f32 %v362, %v431
      %v464 = vadd.f32 %v363, %v432
      %v465 = vadd.f32 %v364, %v433
      %v466 = vadd.f32 %v365, %v434
      %v467 = vadd.f32 %v366, %v435
      %v468 = vadd.f32 %v367, %v436
      %v469 = vadd.f32 %v368, %v437
      %v470 = vadd.f32 %v369, %v438
      %v471 = vadd.f32 %v370, %v439
      %v472 = vadd.f32 %v371, %v440
      %v473 = vadd.f32 %v372, %v441
      %v474 = vadd.f32 %v373, %v442
      %v475 = vadd.f32 %v374, %v443
      %v476 = vadd.f32 %v375, %v444
      %v477 = vadd.f32 %v376, %v445
      %v478 = vadd.f32 %v377, %v446
      %v479 = vadd.f32 %v378, %v447
      %v480 = vadd.f32 %v379, %v448
      %v481 = vadd.f32 %v380, %v449
      %v482 = vadd.f32 %v381, %v450
      %v483 = vadd.f32 %v382, %v451
      %v484 = vadd.f32 %v383, %v452
      %v485 = vadd.f32 %v384, %v453
      %v486 = vadd.f32 %v385, %v454
      %v487 = vadd.f32 %v386, %v455
      %v488 = vadd.f32 %v387, %v456
      %v489 = vadd.f32 %v388, %v457
      %v490 = vadd.f32 %v389, %v458
      %v491 = vadd.f32 %v390, %v459
      %v492 = vadd.f32 %v391, %v460
      %v493 = vadd.f32 %v392, %v461
      %v494 = vadd.f32 %v393, %v462
      %s495 = scalar_lea.vmem %s179, 24
      %v496 = vld [vmem:[%s495] sm:$0xff]
      %v497 = vld [vmem:[%s495 + $0x8] sm:$0xff]
      %v498 = vld [vmem:[%s495 + $0x18] sm:$0xff]
      %v499 = vld [vmem:[%s495 + $0x20] sm:$0xff]
      %v500 = vld [vmem:[%s495 + $0x30] sm:$0xff]
      %v501 = vld [vmem:[%s495 + $0x38] sm:$0xff]
      %v502 = vld [vmem:[%s495 + $0x48] sm:$0xff]
      %v503 = vld [vmem:[%s495 + $0x50] sm:$0xff]
      %v504 = vld [vmem:[%s495 + $0x60] sm:$0xff]
      %v505 = vld [vmem:[%s495 + $0x68] sm:$0xff]
      %v506 = vld [vmem:[%s495 + $0x78] sm:$0xff]
      %v507 = vld [vmem:[%s495 + $0x80] sm:$0xff]
      %v508 = vld [vmem:[%s495 + $0x90] sm:$0xff]
      %v509 = vld [vmem:[%s495 + $0x98] sm:$0xff]
      %v510 = vld [vmem:[%s495 + $0xa8] sm:$0xff]
      %v511 = vld [vmem:[%s495 + $0xb0] sm:$0xff]
      %v512 = vld [vmem:[%s495 + $0xc0] sm:$0xff]
      %v513 = vld [vmem:[%s495 + $0xc8] sm:$0xff]
      %v514 = vld [vmem:[%s495 + $0xd8] sm:$0xff]
      %v515 = vld [vmem:[%s495 + $0xe0] sm:$0xff]
      %v516 = vld [vmem:[%s495 + $0xf0] sm:$0xff]
      %v517 = vld [vmem:[%s495 + $0xf8] sm:$0xff]
      %v518 = vld [vmem:[%s495 + $0x108] sm:$0xff]
      %v519 = vld [vmem:[%s495 + $0x110] sm:$0xff]
      %v520 = vld [vmem:[%s495 + $0x120] sm:$0xff]
      %v521 = vld [vmem:[%s495 + $0x128] sm:$0xff]
      %v522 = vld [vmem:[%s495 + $0x138] sm:$0xff]
      %v523 = vld [vmem:[%s495 + $0x140] sm:$0xff]
      %v524 = vld [vmem:[%s495 + $0x150] sm:$0xff]
      %v525 = vld [vmem:[%s495 + $0x158] sm:$0xff]
      %v526 = vld [vmem:[%s495 + $0x168] sm:$0xff]
      %v527 = vld [vmem:[%s495 + $0x170] sm:$0xff]
      %v528 = vld [vmem:[%s183 + $0x3] sm:$0x1]
      %v529 = vlaneseq
      %v530 = vshrl.u32 %v529, 7
      %v531 = vsub.s32 0, %v530
      %v532 = vrot.slane %v528, %v531
      %v533 = vmul.f32 %v496, %v532
      %v534 = vmul.f32 %v497, %v532
      %v535 = vmul.f32 %v498, %v532
      %v536 = vmul.f32 %v499, %v532
      %v537 = vmul.f32 %v500, %v532
      %v538 = vmul.f32 %v501, %v532
      %v539 = vmul.f32 %v502, %v532
      %v540 = vmul.f32 %v503, %v532
      %v541 = vmul.f32 %v504, %v532
      %v542 = vmul.f32 %v505, %v532
      %v543 = vmul.f32 %v506, %v532
      %v544 = vmul.f32 %v507, %v532
      %v545 = vmul.f32 %v508, %v532
      %v546 = vmul.f32 %v509, %v532
      %v547 = vmul.f32 %v510, %v532
      %v548 = vmul.f32 %v511, %v532
      %v549 = vmul.f32 %v512, %v532
      %v550 = vmul.f32 %v513, %v532
      %v551 = vmul.f32 %v514, %v532
      %v552 = vmul.f32 %v515, %v532
      %v553 = vmul.f32 %v516, %v532
      %v554 = vmul.f32 %v517, %v532
      %v555 = vmul.f32 %v518, %v532
      %v556 = vmul.f32 %v519, %v532
      %v557 = vmul.f32 %v520, %v532
      %v558 = vmul.f32 %v521, %v532
      %v559 = vmul.f32 %v522, %v532
      %v560 = vmul.f32 %v523, %v532
      %v561 = vmul.f32 %v524, %v532
      %v562 = vmul.f32 %v525, %v532
      %v563 = vmul.f32 %v526, %v532
      %v564 = vmul.f32 %v527, %v532
      %v565 = vadd.f32 %v463, %v533
      %v566 = vadd.f32 %v464, %v534
      %v567 = vadd.f32 %v465, %v535
      %v568 = vadd.f32 %v466, %v536
      %v569 = vadd.f32 %v467, %v537
      %v570 = vadd.f32 %v468, %v538
      %v571 = vadd.f32 %v469, %v539
      %v572 = vadd.f32 %v470, %v540
      %v573 = vadd.f32 %v471, %v541
      %v574 = vadd.f32 %v472, %v542
      %v575 = vadd.f32 %v473, %v543
      %v576 = vadd.f32 %v474, %v544
      %v577 = vadd.f32 %v475, %v545
      %v578 = vadd.f32 %v476, %v546
      %v579 = vadd.f32 %v477, %v547
      %v580 = vadd.f32 %v478, %v548
      %v581 = vadd.f32 %v479, %v549
      %v582 = vadd.f32 %v480, %v550
      %v583 = vadd.f32 %v481, %v551
      %v584 = vadd.f32 %v482, %v552
      %v585 = vadd.f32 %v483, %v553
      %v586 = vadd.f32 %v484, %v554
      %v587 = vadd.f32 %v485, %v555
      %v588 = vadd.f32 %v486, %v556
      %v589 = vadd.f32 %v487, %v557
      %v590 = vadd.f32 %v488, %v558
      %v591 = vadd.f32 %v489, %v559
      %v592 = vadd.f32 %v490, %v560
      %v593 = vadd.f32 %v491, %v561
      %v594 = vadd.f32 %v492, %v562
      %v595 = vadd.f32 %v493, %v563
      %v596 = vadd.f32 %v494, %v564
      %v597 = vld [vmem:[%s495 + $0x1] sm:$0xff]
      %v598 = vld [vmem:[%s495 + $0x9] sm:$0xff]
      %v599 = vld [vmem:[%s495 + $0x19] sm:$0xff]
      %v600 = vld [vmem:[%s495 + $0x21] sm:$0xff]
      %v601 = vld [vmem:[%s495 + $0x31] sm:$0xff]
      %v602 = vld [vmem:[%s495 + $0x39] sm:$0xff]
      %v603 = vld [vmem:[%s495 + $0x49] sm:$0xff]
      %v604 = vld [vmem:[%s495 + $0x51] sm:$0xff]
      %v605 = vld [vmem:[%s495 + $0x61] sm:$0xff]
      %v606 = vld [vmem:[%s495 + $0x69] sm:$0xff]
      %v607 = vld [vmem:[%s495 + $0x79] sm:$0xff]
      %v608 = vld [vmem:[%s495 + $0x81] sm:$0xff]
      %v609 = vld [vmem:[%s495 + $0x91] sm:$0xff]
      %v610 = vld [vmem:[%s495 + $0x99] sm:$0xff]
      %v611 = vld [vmem:[%s495 + $0xa9] sm:$0xff]
      %v612 = vld [vmem:[%s495 + $0xb1] sm:$0xff]
      %v613 = vld [vmem:[%s495 + $0xc1] sm:$0xff]
      %v614 = vld [vmem:[%s495 + $0xc9] sm:$0xff]
      %v615 = vld [vmem:[%s495 + $0xd9] sm:$0xff]
      %v616 = vld [vmem:[%s495 + $0xe1] sm:$0xff]
      %v617 = vld [vmem:[%s495 + $0xf1] sm:$0xff]
      %v618 = vld [vmem:[%s495 + $0xf9] sm:$0xff]
      %v619 = vld [vmem:[%s495 + $0x109] sm:$0xff]
      %v620 = vld [vmem:[%s495 + $0x111] sm:$0xff]
      %v621 = vld [vmem:[%s495 + $0x121] sm:$0xff]
      %v622 = vld [vmem:[%s495 + $0x129] sm:$0xff]
      %v623 = vld [vmem:[%s495 + $0x139] sm:$0xff]
      %v624 = vld [vmem:[%s495 + $0x141] sm:$0xff]
      %v625 = vld [vmem:[%s495 + $0x151] sm:$0xff]
      %v626 = vld [vmem:[%s495 + $0x159] sm:$0xff]
      %v627 = vld [vmem:[%s495 + $0x169] sm:$0xff]
      %v628 = vld [vmem:[%s495 + $0x171] sm:$0xff]
      %v629 = vld [vmem:[%s183 + $0x4] sm:$0x1]
      %v630 = vlaneseq
      %v631 = vshrl.u32 %v630, 7
      %v632 = vsub.s32 0, %v631
      %v633 = vrot.slane %v629, %v632
      %v634 = vmul.f32 %v597, %v633
      %v635 = vmul.f32 %v598, %v633
      %v636 = vmul.f32 %v599, %v633
      %v637 = vmul.f32 %v600, %v633
      %v638 = vmul.f32 %v601, %v633
      %v639 = vmul.f32 %v602, %v633
      %v640 = vmul.f32 %v603, %v633
      %v641 = vmul.f32 %v604, %v633
      %v642 = vmul.f32 %v605, %v633
      %v643 = vmul.f32 %v606, %v633
      %v644 = vmul.f32 %v607, %v633
      %v645 = vmul.f32 %v608, %v633
      %v646 = vmul.f32 %v609, %v633
      %v647 = vmul.f32 %v610, %v633
      %v648 = vmul.f32 %v611, %v633
      %v649 = vmul.f32 %v612, %v633
      %v650 = vmul.f32 %v613, %v633
      %v651 = vmul.f32 %v614, %v633
      %v652 = vmul.f32 %v615, %v633
      %v653 = vmul.f32 %v616, %v633
      %v654 = vmul.f32 %v617, %v633
      %v655 = vmul.f32 %v618, %v633
      %v656 = vmul.f32 %v619, %v633
      %v657 = vmul.f32 %v620, %v633
      %v658 = vmul.f32 %v621, %v633
      %v659 = vmul.f32 %v622, %v633
      %v660 = vmul.f32 %v623, %v633
      %v661 = vmul.f32 %v624, %v633
      %v662 = vmul.f32 %v625, %v633
      %v663 = vmul.f32 %v626, %v633
      %v664 = vmul.f32 %v627, %v633
      %v665 = vmul.f32 %v628, %v633
      %v666 = vadd.f32 %v565, %v634
      %v667 = vadd.f32 %v566, %v635
      %v668 = vadd.f32 %v567, %v636
      %v669 = vadd.f32 %v568, %v637
      %v670 = vadd.f32 %v569, %v638
      %v671 = vadd.f32 %v570, %v639
      %v672 = vadd.f32 %v571, %v640
      %v673 = vadd.f32 %v572, %v641
      %v674 = vadd.f32 %v573, %v642
      %v675 = vadd.f32 %v574, %v643
      %v676 = vadd.f32 %v575, %v644
      %v677 = vadd.f32 %v576, %v645
      %v678 = vadd.f32 %v577, %v646
      %v679 = vadd.f32 %v578, %v647
      %v680 = vadd.f32 %v579, %v648
      %v681 = vadd.f32 %v580, %v649
      %v682 = vadd.f32 %v581, %v650
      %v683 = vadd.f32 %v582, %v651
      %v684 = vadd.f32 %v583, %v652
      %v685 = vadd.f32 %v584, %v653
      %v686 = vadd.f32 %v585, %v654
      %v687 = vadd.f32 %v586, %v655
      %v688 = vadd.f32 %v587, %v656
      %v689 = vadd.f32 %v588, %v657
      %v690 = vadd.f32 %v589, %v658
      %v691 = vadd.f32 %v590, %v659
      %v692 = vadd.f32 %v591, %v660
      %v693 = vadd.f32 %v592, %v661
      %v694 = vadd.f32 %v593, %v662
      %v695 = vadd.f32 %v594, %v663
      %v696 = vadd.f32 %v595, %v664
      %v697 = vadd.f32 %v596, %v665
      %v698 = vld [vmem:[%s495 + $0x2] sm:$0xff]
      %v699 = vld [vmem:[%s495 + $0xa] sm:$0xff]
      %v700 = vld [vmem:[%s495 + $0x1a] sm:$0xff]
      %v701 = vld [vmem:[%s495 + $0x22] sm:$0xff]
      %v702 = vld [vmem:[%s495 + $0x32] sm:$0xff]
      %v703 = vld [vmem:[%s495 + $0x3a] sm:$0xff]
      %v704 = vld [vmem:[%s495 + $0x4a] sm:$0xff]
      %v705 = vld [vmem:[%s495 + $0x52] sm:$0xff]
      %v706 = vld [vmem:[%s495 + $0x62] sm:$0xff]
      %v707 = vld [vmem:[%s495 + $0x6a] sm:$0xff]
      %v708 = vld [vmem:[%s495 + $0x7a] sm:$0xff]
      %v709 = vld [vmem:[%s495 + $0x82] sm:$0xff]
      %v710 = vld [vmem:[%s495 + $0x92] sm:$0xff]
      %v711 = vld [vmem:[%s495 + $0x9a] sm:$0xff]
      %v712 = vld [vmem:[%s495 + $0xaa] sm:$0xff]
      %v713 = vld [vmem:[%s495 + $0xb2] sm:$0xff]
      %v714 = vld [vmem:[%s495 + $0xc2] sm:$0xff]
      %v715 = vld [vmem:[%s495 + $0xca] sm:$0xff]
      %v716 = vld [vmem:[%s495 + $0xda] sm:$0xff]
      %v717 = vld [vmem:[%s495 + $0xe2] sm:$0xff]
      %v718 = vld [vmem:[%s495 + $0xf2] sm:$0xff]
      %v719 = vld [vmem:[%s495 + $0xfa] sm:$0xff]
      %v720 = vld [vmem:[%s495 + $0x10a] sm:$0xff]
      %v721 = vld [vmem:[%s495 + $0x112] sm:$0xff]
      %v722 = vld [vmem:[%s495 + $0x122] sm:$0xff]
      %v723 = vld [vmem:[%s495 + $0x12a] sm:$0xff]
      %v724 = vld [vmem:[%s495 + $0x13a] sm:$0xff]
      %v725 = vld [vmem:[%s495 + $0x142] sm:$0xff]
      %v726 = vld [vmem:[%s495 + $0x152] sm:$0xff]
      %v727 = vld [vmem:[%s495 + $0x15a] sm:$0xff]
      %v728 = vld [vmem:[%s495 + $0x16a] sm:$0xff]
      %v729 = vld [vmem:[%s495 + $0x172] sm:$0xff]
      %v730 = vld [vmem:[%s183 + $0x5] sm:$0x1]
      %v731 = vlaneseq
      %v732 = vshrl.u32 %v731, 7
      %v733 = vsub.s32 0, %v732
      %v734 = vrot.slane %v730, %v733
      %v735 = vmul.f32 %v698, %v734
      %v736 = vmul.f32 %v699, %v734
      %v737 = vmul.f32 %v700, %v734
      %v738 = vmul.f32 %v701, %v734
      %v739 = vmul.f32 %v702, %v734
      %v740 = vmul.f32 %v703, %v734
      %v741 = vmul.f32 %v704, %v734
      %v742 = vmul.f32 %v705, %v734
      %v743 = vmul.f32 %v706, %v734
      %v744 = vmul.f32 %v707, %v734
      %v745 = vmul.f32 %v708, %v734
      %v746 = vmul.f32 %v709, %v734
      %v747 = vmul.f32 %v710, %v734
      %v748 = vmul.f32 %v711, %v734
      %v749 = vmul.f32 %v712, %v734
      %v750 = vmul.f32 %v713, %v734
      %v751 = vmul.f32 %v714, %v734
      %v752 = vmul.f32 %v715, %v734
      %v753 = vmul.f32 %v716, %v734
      %v754 = vmul.f32 %v717, %v734
      %v755 = vmul.f32 %v718, %v734
      %v756 = vmul.f32 %v719, %v734
      %v757 = vmul.f32 %v720, %v734
      %v758 = vmul.f32 %v721, %v734
      %v759 = vmul.f32 %v722, %v734
      %v760 = vmul.f32 %v723, %v734
      %v761 = vmul.f32 %v724, %v734
      %v762 = vmul.f32 %v725, %v734
      %v763 = vmul.f32 %v726, %v734
      %v764 = vmul.f32 %v727, %v734
      %v765 = vmul.f32 %v728, %v734
      %v766 = vmul.f32 %v729, %v734
      %v767 = vadd.f32 %v666, %v735
      %v768 = vadd.f32 %v667, %v736
      %v769 = vadd.f32 %v668, %v737
      %v770 = vadd.f32 %v669, %v738
      %v771 = vadd.f32 %v670, %v739
      %v772 = vadd.f32 %v671, %v740
      %v773 = vadd.f32 %v672, %v741
      %v774 = vadd.f32 %v673, %v742
      %v775 = vadd.f32 %v674, %v743
      %v776 = vadd.f32 %v675, %v744
      %v777 = vadd.f32 %v676, %v745
      %v778 = vadd.f32 %v677, %v746
      %v779 = vadd.f32 %v678, %v747
      %v780 = vadd.f32 %v679, %v748
      %v781 = vadd.f32 %v680, %v749
      %v782 = vadd.f32 %v681, %v750
      %v783 = vadd.f32 %v682, %v751
      %v784 = vadd.f32 %v683, %v752
      %v785 = vadd.f32 %v684, %v753
      %v786 = vadd.f32 %v685, %v754
      %v787 = vadd.f32 %v686, %v755
      %v788 = vadd.f32 %v687, %v756
      %v789 = vadd.f32 %v688, %v757
      %v790 = vadd.f32 %v689, %v758
      %v791 = vadd.f32 %v690, %v759
      %v792 = vadd.f32 %v691, %v760
      %v793 = vadd.f32 %v692, %v761
      %v794 = vadd.f32 %v693, %v762
      %v795 = vadd.f32 %v694, %v763
      %v796 = vadd.f32 %v695, %v764
      %v797 = vadd.f32 %v696, %v765
      %v798 = vadd.f32 %v697, %v766
      %s799 = scalar_lea.vmem %s179, 48
      %v800 = vld [vmem:[%s799] sm:$0xff]
      %v801 = vld [vmem:[%s799 + $0x8] sm:$0xff]
      %v802 = vld [vmem:[%s799 + $0x18] sm:$0xff]
      %v803 = vld [vmem:[%s799 + $0x20] sm:$0xff]
      %v804 = vld [vmem:[%s799 + $0x30] sm:$0xff]
      %v805 = vld [vmem:[%s799 + $0x38] sm:$0xff]
      %v806 = vld [vmem:[%s799 + $0x48] sm:$0xff]
      %v807 = vld [vmem:[%s799 + $0x50] sm:$0xff]
      %v808 = vld [vmem:[%s799 + $0x60] sm:$0xff]
      %v809 = vld [vmem:[%s799 + $0x68] sm:$0xff]
      %v810 = vld [vmem:[%s799 + $0x78] sm:$0xff]
      %v811 = vld [vmem:[%s799 + $0x80] sm:$0xff]
      %v812 = vld [vmem:[%s799 + $0x90] sm:$0xff]
      %v813 = vld [vmem:[%s799 + $0x98] sm:$0xff]
      %v814 = vld [vmem:[%s799 + $0xa8] sm:$0xff]
      %v815 = vld [vmem:[%s799 + $0xb0] sm:$0xff]
      %v816 = vld [vmem:[%s799 + $0xc0] sm:$0xff]
      %v817 = vld [vmem:[%s799 + $0xc8] sm:$0xff]
      %v818 = vld [vmem:[%s799 + $0xd8] sm:$0xff]
      %v819 = vld [vmem:[%s799 + $0xe0] sm:$0xff]
      %v820 = vld [vmem:[%s799 + $0xf0] sm:$0xff]
      %v821 = vld [vmem:[%s799 + $0xf8] sm:$0xff]
      %v822 = vld [vmem:[%s799 + $0x108] sm:$0xff]
      %v823 = vld [vmem:[%s799 + $0x110] sm:$0xff]
      %v824 = vld [vmem:[%s799 + $0x120] sm:$0xff]
      %v825 = vld [vmem:[%s799 + $0x128] sm:$0xff]
      %v826 = vld [vmem:[%s799 + $0x138] sm:$0xff]
      %v827 = vld [vmem:[%s799 + $0x140] sm:$0xff]
      %v828 = vld [vmem:[%s799 + $0x150] sm:$0xff]
      %v829 = vld [vmem:[%s799 + $0x158] sm:$0xff]
      %v830 = vld [vmem:[%s799 + $0x168] sm:$0xff]
      %v831 = vld [vmem:[%s799 + $0x170] sm:$0xff]
      %v832 = vld [vmem:[%s183 + $0x6] sm:$0x1]
      %v833 = vlaneseq
      %v834 = vshrl.u32 %v833, 7
      %v835 = vsub.s32 0, %v834
      %v836 = vrot.slane %v832, %v835
      %v837 = vmul.f32 %v800, %v836
      %v838 = vmul.f32 %v801, %v836
      %v839 = vmul.f32 %v802, %v836
      %v840 = vmul.f32 %v803, %v836
      %v841 = vmul.f32 %v804, %v836
      %v842 = vmul.f32 %v805, %v836
      %v843 = vmul.f32 %v806, %v836
      %v844 = vmul.f32 %v807, %v836
      %v845 = vmul.f32 %v808, %v836
      %v846 = vmul.f32 %v809, %v836
      %v847 = vmul.f32 %v810, %v836
      %v848 = vmul.f32 %v811, %v836
      %v849 = vmul.f32 %v812, %v836
      %v850 = vmul.f32 %v813, %v836
      %v851 = vmul.f32 %v814, %v836
      %v852 = vmul.f32 %v815, %v836
      %v853 = vmul.f32 %v816, %v836
      %v854 = vmul.f32 %v817, %v836
      %v855 = vmul.f32 %v818, %v836
      %v856 = vmul.f32 %v819, %v836
      %v857 = vmul.f32 %v820, %v836
      %v858 = vmul.f32 %v821, %v836
      %v859 = vmul.f32 %v822, %v836
      %v860 = vmul.f32 %v823, %v836
      %v861 = vmul.f32 %v824, %v836
      %v862 = vmul.f32 %v825, %v836
      %v863 = vmul.f32 %v826, %v836
      %v864 = vmul.f32 %v827, %v836
      %v865 = vmul.f32 %v828, %v836
      %v866 = vmul.f32 %v829, %v836
      %v867 = vmul.f32 %v830, %v836
      %v868 = vmul.f32 %v831, %v836
      %v869 = vadd.f32 %v767, %v837
      %v870 = vadd.f32 %v768, %v838
      %v871 = vadd.f32 %v769, %v839
      %v872 = vadd.f32 %v770, %v840
      %v873 = vadd.f32 %v771, %v841
      %v874 = vadd.f32 %v772, %v842
      %v875 = vadd.f32 %v773, %v843
      %v876 = vadd.f32 %v774, %v844
      %v877 = vadd.f32 %v775, %v845
      %v878 = vadd.f32 %v776, %v846
      %v879 = vadd.f32 %v777, %v847
      %v880 = vadd.f32 %v778, %v848
      %v881 = vadd.f32 %v779, %v849
      %v882 = vadd.f32 %v780, %v850
      %v883 = vadd.f32 %v781, %v851
      %v884 = vadd.f32 %v782, %v852
      %v885 = vadd.f32 %v783, %v853
      %v886 = vadd.f32 %v784, %v854
      %v887 = vadd.f32 %v785, %v855
      %v888 = vadd.f32 %v786, %v856
      %v889 = vadd.f32 %v787, %v857
      %v890 = vadd.f32 %v788, %v858
      %v891 = vadd.f32 %v789, %v859
      %v892 = vadd.f32 %v790, %v860
      %v893 = vadd.f32 %v791, %v861
      %v894 = vadd.f32 %v792, %v862
      %v895 = vadd.f32 %v793, %v863
      %v896 = vadd.f32 %v794, %v864
      %v897 = vadd.f32 %v795, %v865
      %v898 = vadd.f32 %v796, %v866
      %v899 = vadd.f32 %v797, %v867
      %v900 = vadd.f32 %v798, %v868
      %v901 = vld [vmem:[%s799 + $0x1] sm:$0xff]
      %v902 = vld [vmem:[%s799 + $0x9] sm:$0xff]
      %v903 = vld [vmem:[%s799 + $0x19] sm:$0xff]
      %v904 = vld [vmem:[%s799 + $0x21] sm:$0xff]
      %v905 = vld [vmem:[%s799 + $0x31] sm:$0xff]
      %v906 = vld [vmem:[%s799 + $0x39] sm:$0xff]
      %v907 = vld [vmem:[%s799 + $0x49] sm:$0xff]
      %v908 = vld [vmem:[%s799 + $0x51] sm:$0xff]
      %v909 = vld [vmem:[%s799 + $0x61] sm:$0xff]
      %v910 = vld [vmem:[%s799 + $0x69] sm:$0xff]
      %v911 = vld [vmem:[%s799 + $0x79] sm:$0xff]
      %v912 = vld [vmem:[%s799 + $0x81] sm:$0xff]
      %v913 = vld [vmem:[%s799 + $0x91] sm:$0xff]
      %v914 = vld [vmem:[%s799 + $0x99] sm:$0xff]
      %v915 = vld [vmem:[%s799 + $0xa9] sm:$0xff]
      %v916 = vld [vmem:[%s799 + $0xb1] sm:$0xff]
      %v917 = vld [vmem:[%s799 + $0xc1] sm:$0xff]
      %v918 = vld [vmem:[%s799 + $0xc9] sm:$0xff]
      %v919 = vld [vmem:[%s799 + $0xd9] sm:$0xff]
      %v920 = vld [vmem:[%s799 + $0xe1] sm:$0xff]
      %v921 = vld [vmem:[%s799 + $0xf1] sm:$0xff]
      %v922 = vld [vmem:[%s799 + $0xf9] sm:$0xff]
      %v923 = vld [vmem:[%s799 + $0x109] sm:$0xff]
      %v924 = vld [vmem:[%s799 + $0x111] sm:$0xff]
      %v925 = vld [vmem:[%s799 + $0x121] sm:$0xff]
      %v926 = vld [vmem:[%s799 + $0x129] sm:$0xff]
      %v927 = vld [vmem:[%s799 + $0x139] sm:$0xff]
      %v928 = vld [vmem:[%s799 + $0x141] sm:$0xff]
      %v929 = vld [vmem:[%s799 + $0x151] sm:$0xff]
      %v930 = vld [vmem:[%s799 + $0x159] sm:$0xff]
      %v931 = vld [vmem:[%s799 + $0x169] sm:$0xff]
      %v932 = vld [vmem:[%s799 + $0x171] sm:$0xff]
      %v933 = vld [vmem:[%s183 + $0x7] sm:$0x1]
      %v934 = vlaneseq
      %v935 = vshrl.u32 %v934, 7
      %v936 = vsub.s32 0, %v935
      %v937 = vrot.slane %v933, %v936
      %v938 = vmul.f32 %v901, %v937
      %v939 = vmul.f32 %v902, %v937
      %v940 = vmul.f32 %v903, %v937
      %v941 = vmul.f32 %v904, %v937
      %v942 = vmul.f32 %v905, %v937
      %v943 = vmul.f32 %v906, %v937
      %v944 = vmul.f32 %v907, %v937
      %v945 = vmul.f32 %v908, %v937
      %v946 = vmul.f32 %v909, %v937
      %v947 = vmul.f32 %v910, %v937
      %v948 = vmul.f32 %v911, %v937
      %v949 = vmul.f32 %v912, %v937
      %v950 = vmul.f32 %v913, %v937
      %v951 = vmul.f32 %v914, %v937
      %v952 = vmul.f32 %v915, %v937
      %v953 = vmul.f32 %v916, %v937
      %v954 = vmul.f32 %v917, %v937
      %v955 = vmul.f32 %v918, %v937
      %v956 = vmul.f32 %v919, %v937
      %v957 = vmul.f32 %v920, %v937
      %v958 = vmul.f32 %v921, %v937
      %v959 = vmul.f32 %v922, %v937
      %v960 = vmul.f32 %v923, %v937
      %v961 = vmul.f32 %v924, %v937
      %v962 = vmul.f32 %v925, %v937
      %v963 = vmul.f32 %v926, %v937
      %v964 = vmul.f32 %v927, %v937
      %v965 = vmul.f32 %v928, %v937
      %v966 = vmul.f32 %v929, %v937
      %v967 = vmul.f32 %v930, %v937
      %v968 = vmul.f32 %v931, %v937
      %v969 = vmul.f32 %v932, %v937
      %v970 = vadd.f32 %v869, %v938
      %v971 = vadd.f32 %v870, %v939
      %v972 = vadd.f32 %v871, %v940
      %v973 = vadd.f32 %v872, %v941
      %v974 = vadd.f32 %v873, %v942
      %v975 = vadd.f32 %v874, %v943
      %v976 = vadd.f32 %v875, %v944
      %v977 = vadd.f32 %v876, %v945
      %v978 = vadd.f32 %v877, %v946
      %v979 = vadd.f32 %v878, %v947
      %v980 = vadd.f32 %v879, %v948
      %v981 = vadd.f32 %v880, %v949
      %v982 = vadd.f32 %v881, %v950
      %v983 = vadd.f32 %v882, %v951
      %v984 = vadd.f32 %v883, %v952
      %v985 = vadd.f32 %v884, %v953
      %v986 = vadd.f32 %v885, %v954
      %v987 = vadd.f32 %v886, %v955
      %v988 = vadd.f32 %v887, %v956
      %v989 = vadd.f32 %v888, %v957
      %v990 = vadd.f32 %v889, %v958
      %v991 = vadd.f32 %v890, %v959
      %v992 = vadd.f32 %v891, %v960
      %v993 = vadd.f32 %v892, %v961
      %v994 = vadd.f32 %v893, %v962
      %v995 = vadd.f32 %v894, %v963
      %v996 = vadd.f32 %v895, %v964
      %v997 = vadd.f32 %v896, %v965
      %v998 = vadd.f32 %v897, %v966
      %v999 = vadd.f32 %v898, %v967
      %v1000 = vadd.f32 %v899, %v968
      %v1001 = vadd.f32 %v900, %v969
      %v1002 = vld [vmem:[%s799 + $0x2] sm:$0xff]
      %v1003 = vld [vmem:[%s799 + $0xa] sm:$0xff]
      %v1004 = vld [vmem:[%s799 + $0x1a] sm:$0xff]
      %v1005 = vld [vmem:[%s799 + $0x22] sm:$0xff]
      %v1006 = vld [vmem:[%s799 + $0x32] sm:$0xff]
      %v1007 = vld [vmem:[%s799 + $0x3a] sm:$0xff]
      %v1008 = vld [vmem:[%s799 + $0x4a] sm:$0xff]
      %v1009 = vld [vmem:[%s799 + $0x52] sm:$0xff]
      %v1010 = vld [vmem:[%s799 + $0x62] sm:$0xff]
      %v1011 = vld [vmem:[%s799 + $0x6a] sm:$0xff]
      %v1012 = vld [vmem:[%s799 + $0x7a] sm:$0xff]
      %v1013 = vld [vmem:[%s799 + $0x82] sm:$0xff]
      %v1014 = vld [vmem:[%s799 + $0x92] sm:$0xff]
      %v1015 = vld [vmem:[%s799 + $0x9a] sm:$0xff]
      %v1016 = vld [vmem:[%s799 + $0xaa] sm:$0xff]
      %v1017 = vld [vmem:[%s799 + $0xb2] sm:$0xff]
      %v1018 = vld [vmem:[%s799 + $0xc2] sm:$0xff]
      %v1019 = vld [vmem:[%s799 + $0xca] sm:$0xff]
      %v1020 = vld [vmem:[%s799 + $0xda] sm:$0xff]
      %v1021 = vld [vmem:[%s799 + $0xe2] sm:$0xff]
      %v1022 = vld [vmem:[%s799 + $0xf2] sm:$0xff]
      %v1023 = vld [vmem:[%s799 + $0xfa] sm:$0xff]
      %v1024 = vld [vmem:[%s799 + $0x10a] sm:$0xff]
      %v1025 = vld [vmem:[%s799 + $0x112] sm:$0xff]
      %v1026 = vld [vmem:[%s799 + $0x122] sm:$0xff]
      %v1027 = vld [vmem:[%s799 + $0x12a] sm:$0xff]
      %v1028 = vld [vmem:[%s799 + $0x13a] sm:$0xff]
      %v1029 = vld [vmem:[%s799 + $0x142] sm:$0xff]
      %v1030 = vld [vmem:[%s799 + $0x152] sm:$0xff]
      %v1031 = vld [vmem:[%s799 + $0x15a] sm:$0xff]
      %v1032 = vld [vmem:[%s799 + $0x16a] sm:$0xff]
      %v1033 = vld [vmem:[%s799 + $0x172] sm:$0xff]
      %v1034 = vld [vmem:[%s183 + $0x8] sm:$0x1]
      %v1035 = vlaneseq
      %v1036 = vshrl.u32 %v1035, 7
      %v1037 = vsub.s32 0, %v1036
      %v1038 = vrot.slane %v1034, %v1037
      %v1039 = vmul.f32 %v1002, %v1038
      %v1040 = vmul.f32 %v1003, %v1038
      %v1041 = vmul.f32 %v1004, %v1038
      %v1042 = vmul.f32 %v1005, %v1038
      %v1043 = vmul.f32 %v1006, %v1038
      %v1044 = vmul.f32 %v1007, %v1038
      %v1045 = vmul.f32 %v1008, %v1038
      %v1046 = vmul.f32 %v1009, %v1038
      %v1047 = vmul.f32 %v1010, %v1038
      %v1048 = vmul.f32 %v1011, %v1038
      %v1049 = vmul.f32 %v1012, %v1038
      %v1050 = vmul.f32 %v1013, %v1038
      %v1051 = vmul.f32 %v1014, %v1038
      %v1052 = vmul.f32 %v1015, %v1038
      %v1053 = vmul.f32 %v1016, %v1038
      %v1054 = vmul.f32 %v1017, %v1038
      %v1055 = vmul.f32 %v1018, %v1038
      %v1056 = vmul.f32 %v1019, %v1038
      %v1057 = vmul.f32 %v1020, %v1038
      %v1058 = vmul.f32 %v1021, %v1038
      %v1059 = vmul.f32 %v1022, %v1038
      %v1060 = vmul.f32 %v1023, %v1038
      %v1061 = vmul.f32 %v1024, %v1038
      %v1062 = vmul.f32 %v1025, %v1038
      %v1063 = vmul.f32 %v1026, %v1038
      %v1064 = vmul.f32 %v1027, %v1038
      %v1065 = vmul.f32 %v1028, %v1038
      %v1066 = vmul.f32 %v1029, %v1038
      %v1067 = vmul.f32 %v1030, %v1038
      %v1068 = vmul.f32 %v1031, %v1038
      %v1069 = vmul.f32 %v1032, %v1038
      %v1070 = vmul.f32 %v1033, %v1038
      %v1071 = vadd.f32 %v970, %v1039
      %v1072 = vadd.f32 %v971, %v1040
      %v1073 = vadd.f32 %v972, %v1041
      %v1074 = vadd.f32 %v973, %v1042
      %v1075 = vadd.f32 %v974, %v1043
      %v1076 = vadd.f32 %v975, %v1044
      %v1077 = vadd.f32 %v976, %v1045
      %v1078 = vadd.f32 %v977, %v1046
      %v1079 = vadd.f32 %v978, %v1047
      %v1080 = vadd.f32 %v979, %v1048
      %v1081 = vadd.f32 %v980, %v1049
      %v1082 = vadd.f32 %v981, %v1050
      %v1083 = vadd.f32 %v982, %v1051
      %v1084 = vadd.f32 %v983, %v1052
      %v1085 = vadd.f32 %v984, %v1053
      %v1086 = vadd.f32 %v985, %v1054
      %v1087 = vadd.f32 %v986, %v1055
      %v1088 = vadd.f32 %v987, %v1056
      %v1089 = vadd.f32 %v988, %v1057
      %v1090 = vadd.f32 %v989, %v1058
      %v1091 = vadd.f32 %v990, %v1059
      %v1092 = vadd.f32 %v991, %v1060
      %v1093 = vadd.f32 %v992, %v1061
      %v1094 = vadd.f32 %v993, %v1062
      %v1095 = vadd.f32 %v994, %v1063
      %v1096 = vadd.f32 %v995, %v1064
      %v1097 = vadd.f32 %v996, %v1065
      %v1098 = vadd.f32 %v997, %v1066
      %v1099 = vadd.f32 %v998, %v1067
      %v1100 = vadd.f32 %v999, %v1068
      %v1101 = vadd.f32 %v1000, %v1069
      %v1102 = vadd.f32 %v1001, %v1070
      %v1103 = vpack.c.bf16 %v1072, %v1071
      %v1104 = vpack.c.bf16 %v1074, %v1073
      %v1105 = vpack.c.bf16 %v1076, %v1075
      %v1106 = vpack.c.bf16 %v1078, %v1077
      %v1107 = vpack.c.bf16 %v1080, %v1079
      %v1108 = vpack.c.bf16 %v1082, %v1081
      %v1109 = vpack.c.bf16 %v1084, %v1083
      %v1110 = vpack.c.bf16 %v1086, %v1085
      %v1111 = vpack.c.bf16 %v1088, %v1087
      %v1112 = vpack.c.bf16 %v1090, %v1089
      %v1113 = vpack.c.bf16 %v1092, %v1091
      %v1114 = vpack.c.bf16 %v1094, %v1093
      %v1115 = vpack.c.bf16 %v1096, %v1095
      %v1116 = vpack.c.bf16 %v1098, %v1097
      %v1117 = vpack.c.bf16 %v1100, %v1099
      %v1118 = vpack.c.bf16 %v1102, %v1101
      %v1135 = vunpack.c.l.b16 %v1103
      %v1136 = vunpack.c.h.b16 %v1103
      %v1137 = vunpack.c.l.b16 %v1104
      %v1138 = vunpack.c.h.b16 %v1104
      %v1139 = vunpack.c.l.b16 %v1105
      %v1140 = vunpack.c.h.b16 %v1105
      %v1141 = vunpack.c.l.b16 %v1106
      %v1142 = vunpack.c.h.b16 %v1106
      %v1143 = vunpack.c.l.b16 %v1107
      %v1144 = vunpack.c.h.b16 %v1107
      %v1145 = vunpack.c.l.b16 %v1108
      %v1146 = vunpack.c.h.b16 %v1108
      %v1147 = vunpack.c.l.b16 %v1109
      %v1148 = vunpack.c.h.b16 %v1109
      %v1149 = vunpack.c.l.b16 %v1110
      %v1150 = vunpack.c.h.b16 %v1110
      %v1151 = vunpack.c.l.b16 %v1111
      %v1152 = vunpack.c.h.b16 %v1111
      %v1153 = vunpack.c.l.b16 %v1112
      %v1154 = vunpack.c.h.b16 %v1112
      %v1155 = vunpack.c.l.b16 %v1113
      %v1156 = vunpack.c.h.b16 %v1113
      %v1157 = vunpack.c.l.b16 %v1114
      %v1158 = vunpack.c.h.b16 %v1114
      %v1159 = vunpack.c.l.b16 %v1115
      %v1160 = vunpack.c.h.b16 %v1115
      %v1161 = vunpack.c.l.b16 %v1116
      %v1162 = vunpack.c.h.b16 %v1116
      %v1163 = vunpack.c.l.b16 %v1117
      %v1164 = vunpack.c.h.b16 %v1117
      %v1165 = vunpack.c.l.b16 %v1118
      %v1166 = vunpack.c.h.b16 %v1118
      %v1167 = vpack.c.b16 %v1135, %v1135
      %v1168 = vpack.c.b16 %v1136, %v1136
      %v1169 = vpack.c.b16 %v1137, %v1137
      %v1170 = vpack.c.b16 %v1138, %v1138
      %v1171 = vpack.c.b16 %v1139, %v1139
      %v1172 = vpack.c.b16 %v1140, %v1140
      %v1173 = vpack.c.b16 %v1141, %v1141
      %v1174 = vpack.c.b16 %v1142, %v1142
      %v1175 = vpack.c.b16 %v1143, %v1143
      %v1176 = vpack.c.b16 %v1144, %v1144
      %v1177 = vpack.c.b16 %v1145, %v1145
      %v1178 = vpack.c.b16 %v1146, %v1146
      %v1179 = vpack.c.b16 %v1147, %v1147
      %v1180 = vpack.c.b16 %v1148, %v1148
      %v1181 = vpack.c.b16 %v1149, %v1149
      %v1182 = vpack.c.b16 %v1150, %v1150
      %v1183 = vpack.c.b16 %v1151, %v1151
      %v1184 = vpack.c.b16 %v1152, %v1152
      %v1185 = vpack.c.b16 %v1153, %v1153
      %v1186 = vpack.c.b16 %v1154, %v1154
      %v1187 = vpack.c.b16 %v1155, %v1155
      %v1188 = vpack.c.b16 %v1156, %v1156
      %v1189 = vpack.c.b16 %v1157, %v1157
      %v1190 = vpack.c.b16 %v1158, %v1158
      %v1191 = vpack.c.b16 %v1159, %v1159
      %v1192 = vpack.c.b16 %v1160, %v1160
      %v1193 = vpack.c.b16 %v1161, %v1161
      %v1194 = vpack.c.b16 %v1162, %v1162
      %v1195 = vpack.c.b16 %v1163, %v1163
      %v1196 = vpack.c.b16 %v1164, %v1164
      %v1197 = vpack.c.b16 %v1165, %v1165
      %v1198 = vpack.c.b16 %v1166, %v1166
      %1231 = vst [vmem:[%s191] sm:$0xf] %v1167
      %1232 = vst [vmem:[%s191 + $0x4] sm:$0xf] %v1168
      %1233 = vst [vmem:[%s191 + $0x8] sm:$0xf] %v1169
      %1234 = vst [vmem:[%s191 + $0xc] sm:$0xf] %v1170
      %1235 = vst [vmem:[%s191 + $0x10] sm:$0xf] %v1171
      %1236 = vst [vmem:[%s191 + $0x14] sm:$0xf] %v1172
      %1237 = vst [vmem:[%s191 + $0x18] sm:$0xf] %v1173
      %1238 = vst [vmem:[%s191 + $0x1c] sm:$0xf] %v1174
      %1239 = vst [vmem:[%s191 + $0x20] sm:$0xf] %v1175
      %1240 = vst [vmem:[%s191 + $0x24] sm:$0xf] %v1176
      %1241 = vst [vmem:[%s191 + $0x28] sm:$0xf] %v1177
      %1242 = vst [vmem:[%s191 + $0x2c] sm:$0xf] %v1178
      %1243 = vst [vmem:[%s191 + $0x30] sm:$0xf] %v1179
      %1244 = vst [vmem:[%s191 + $0x34] sm:$0xf] %v1180
      %1245 = vst [vmem:[%s191 + $0x38] sm:$0xf] %v1181
      %1246 = vst [vmem:[%s191 + $0x3c] sm:$0xf] %v1182
      %1247 = vst [vmem:[%s191 + $0x40] sm:$0xf] %v1183
      %1248 = vst [vmem:[%s191 + $0x44] sm:$0xf] %v1184
      %1249 = vst [vmem:[%s191 + $0x48] sm:$0xf] %v1185
      %1250 = vst [vmem:[%s191 + $0x4c] sm:$0xf] %v1186
      %1251 = vst [vmem:[%s191 + $0x50] sm:$0xf] %v1187
      %1252 = vst [vmem:[%s191 + $0x54] sm:$0xf] %v1188
      %1253 = vst [vmem:[%s191 + $0x58] sm:$0xf] %v1189
      %1254 = vst [vmem:[%s191 + $0x5c] sm:$0xf] %v1190
      %1255 = vst [vmem:[%s191 + $0x60] sm:$0xf] %v1191
      %1256 = vst [vmem:[%s191 + $0x64] sm:$0xf] %v1192
      %1257 = vst [vmem:[%s191 + $0x68] sm:$0xf] %v1193
      %1258 = vst [vmem:[%s191 + $0x6c] sm:$0xf] %v1194
      %1259 = vst [vmem:[%s191 + $0x70] sm:$0xf] %v1195
      %1260 = vst [vmem:[%s191 + $0x74] sm:$0xf] %v1196
      %1261 = vst [vmem:[%s191 + $0x78] sm:$0xf] %v1197
      %1262 = vst [vmem:[%s191 + $0x7c] sm:$0xf] %v1198
      %p1263 = scmp.lt.s32.totalorder %s17, 1
      %s1264 = scalar_select %p1263, %s17, 1
      %p1265 = scmp.lt.s32.totalorder %s18, 0
      %s1266 = scalar_select %p1265, %s18, 0
      %s1267 = smul.addr %s1264, 32
      %s1268 = sadd.s32 %s1266, %s1267
      %s1269 = smul.addr %s1268, 4
      %s1270 = scalar_lea.vmem %s2, %s1269
      // Predicated region
      $region29: #{seq_conv_bn_relu_forward.2} parent=27 // pred_check
        %p1271 = pneg %p99
      $region30: #{seq_conv_bn_relu_forward.2} parent=27 // pred_check_branch
        %1273 = sbr.rel (%p1271) target = $region32
      $region31: #{seq_conv_bn_relu_forward.2} parent=27 // pred_region
        _
      $region32: #{seq_conv_bn_relu_forward.2} parent=27 // pred_fallthru
        _
    $region28: #{seq_conv_bn_relu_forward.2} parent=5 // pred_fallthru
      _
    %p1274 = scmp.le.s32.totalorder 2, %s8
    // Predicated region
    $region33: #{seq_conv_bn_relu_forward.2} parent=5 // pred_check
      %p1275 = pneg %p1274
    $region34: #{seq_conv_bn_relu_forward.2} parent=5 // pred_check_branch
      %1277 = sbr.rel (%p1275) target = $region36
    $region35: #{seq_conv_bn_relu_forward.2} parent=5 // pred_region
      %s1278 = ssub.s32 %s8, 2
      // Predicated region
      $region37: #{seq_conv_bn_relu_forward.2} parent=35 // pred_check
        %p1279 = pneg %p105
      $region38: #{seq_conv_bn_relu_forward.2} parent=35 // pred_check_branch
        %1281 = sbr.rel (%p1279) target = $region40
      $region39: #{seq_conv_bn_relu_forward.2} parent=35 // pred_region
        %p1282 = scmp.lt.s32.totalorder %s19, 1
        %s1283 = scalar_select %p1282, %s19, 1
        %p1284 = scmp.lt.s32.totalorder %s20, 0
        %s1285 = scalar_select %p1284, %s20, 0
        %s1286 = smul.addr %s1283, 32
        %s1287 = sadd.s32 %s1285, %s1286
        %s1288 = smul.addr %s1287, 4
        %s1289 = scalar_lea.vmem %s2, %s1288
      $region40: #{seq_conv_bn_relu_forward.2} parent=35 // pred_fallthru
        _
    $region36: #{seq_conv_bn_relu_forward.2} parent=5 // pred_fallthru
      _
  $region6: #{seq_conv_bn_relu_forward.2} parent=0 // loop_footer
    %s12 = sadd.s32 1, %s8
  $region7: #{seq_conv_bn_relu_forward.2} parent=0 // loop_footer_branch
    %7 = sbr.rel target = $region3
  $region8: #{seq_conv_bn_relu_forward.2} parent=0 // loop_exit
    _

</llo_original>
